<compile_context>
chip_gen: v6e
topology: v6e:2x2x1
jax: 0.10.0
libtpu: 0.0.40
codegen_flags: <defaults>
</compile_context>

<pallas_src>
import functools

import jax
import jax.numpy as jnp
from jax import lax
from jax.experimental import pallas as pl
from jax.experimental.pallas import tpu as pltpu


# ----------------------------------------------------------------------------
# Fused Pallas kernel: num_layers x LSTM + (Linear(H,1) + Sigmoid) head
# ----------------------------------------------------------------------------
def _make_fused_kernel(num_layers, T, Bp, H):
    def kernel(x_ref, *rest):
        # rest = [w_ih_t_0, w_hh_t_0, b_0, ..., w_ih_t_{L-1}, w_hh_t_{L-1},
        #         b_{L-1}, fc_w, fc_b,  out_ref,  hs_ref, gx_ref]
        n_w = 3 * num_layers
        layer_refs = rest[:n_w]
        fc_w_ref, fc_b_ref, out_ref, hs_ref, gx_ref = rest[n_w:]

        # Lane mask selecting the "g" gate block (hoisted out of all loops).
        lane = lax.broadcasted_iota(jnp.int32, (Bp, 4 * H), 1)
        g_mask = (lane >= 2 * H) & (lane < 3 * H)

        h_last = jnp.zeros((Bp, H), jnp.float32)

        for l in range(num_layers):
            w_ih_t = layer_refs[3 * l][...]      # (D_l, 4H), pre-transposed
            w_hh_t = layer_refs[3 * l + 1][...]  # (H,  4H), pre-transposed
            bias = layer_refs[3 * l + 2][...]    # (1, 4H) = b_ih + b_hh

            # Input sequence for this layer (layer 0: x, else previous layer's
            # hidden states living in VMEM scratch).
            if l == 0:
                seq = x_ref[...]                 # (T, Bp, D)
            else:
                seq = hs_ref[...]                # (T, Bp, H)
            d_in = seq.shape[-1]

            # Hoisted input projection: one big MXU matmul over the whole
            # sequence instead of T skinny per-step matmuls.
            gx = (
                jnp.dot(
                    seq.reshape(T * Bp, d_in),
                    w_ih_t,
                    preferred_element_type=jnp.float32,
                )
                + bias
            )
            gx_ref[...] = gx.reshape(T, Bp, 4 * H)

            write_hs = l < num_layers - 1        # last layer only needs h_last

            def step(t, carry, w_hh_t=w_hh_t, write_hs=write_hs):
                h, c = carry                     # (Bp, H), (Bp, H)
                gates = gx_ref[t] + jnp.dot(
                    h, w_hh_t, preferred_element_type=jnp.float32
                )                                # (Bp, 4H)
                # Whole-vreg sigmoid + masked tanh keeps the (Bp, 4H) vreg
                # lane-dense; static slices below are only cheap VPU reads.
                act = jnp.where(g_mask, jnp.tanh(gates), jax.nn.sigmoid(gates))
                i = act[:, 0 * H:1 * H]
                f = act[:, 1 * H:2 * H]
                g = act[:, 2 * H:3 * H]
                o = act[:, 3 * H:4 * H]
                c_new = f * c + i * g
                h_new = o * jnp.tanh(c_new)
                if write_hs:
                    hs_ref[t] = h_new            # feed next layer (VMEM only)
                return (h_new, c_new)

            h0 = jnp.zeros((Bp, H), jnp.float32)
            c0 = jnp.zeros((Bp, H), jnp.float32)
            h_last, _ = lax.fori_loop(0, T, step, (h0, c0), unroll=True)

        # FC + sigmoid head as a VPU lane reduction (avoids a 1-column MXU
        # matmul and its drain latency).
        logits = (
            jnp.sum(h_last * fc_w_ref[...], axis=-1, keepdims=True)
            + fc_b_ref[...]
        )                                        # (Bp, 1)
        out_ref[...] = jax.nn.sigmoid(logits)

    return kernel


# ----------------------------------------------------------------------------
# Wrapper (layout plumbing in plain JAX)
# ----------------------------------------------------------------------------
_VMEM_SPEC = pl.BlockSpec(memory_space=pltpu.MemorySpace.VMEM)


@functools.partial(jax.jit, static_argnames=())
def _identity(x):
    return x


def lstmnet_forward(x, lstm_params, fc_w, fc_b):
    """x: (B, T, input_size) float32.  Returns (B, 1) float32."""
    B, T, _ = x.shape
    H = lstm_params[0][1].shape[1]
    num_layers = len(lstm_params)

    # Pad batch to a multiple of 8 sublanes for f32 state vregs.
    Bp = ((B + 7) // 8) * 8

    xs = jnp.transpose(x, (1, 0, 2))             # time-major (T, B, D)
    if Bp != B:
        xs = jnp.pad(xs, ((0, 0), (0, Bp - B), (0, 0)))

    # Pre-transpose weights + fold biases in the wrapper (free layout work).
    flat = []
    for (w_ih, w_hh, b_ih, b_hh) in lstm_params:
        flat.append(jnp.asarray(w_ih).T)                          # (D_l, 4H)
        flat.append(jnp.asarray(w_hh).T)                          # (H,  4H)
        flat.append((b_ih + b_hh).reshape(1, 4 * H))              # (1, 4H)

    kernel = _make_fused_kernel(num_layers, T, Bp, H)
    n_in = 1 + 3 * num_layers + 2

    out = pl.pallas_call(
        kernel,
        out_shape=jax.ShapeDtypeStruct((Bp, 1), jnp.float32),
        in_specs=[_VMEM_SPEC] * n_in,
        out_specs=_VMEM_SPEC,
        scratch_shapes=[
            pltpu.VMEM((T, Bp, H), jnp.float32),       # inter-layer hiddens
            pltpu.VMEM((T, Bp, 4 * H), jnp.float32),   # hoisted gate_x
        ],
        compiler_params=pltpu.CompilerParams(
            vmem_limit_bytes=32 * 1024 * 1024,
        ),
    )(xs, *flat, fc_w, fc_b.reshape(1, 1))

    return out[:B]


# ----------------------------------------------------------------------------
# Pure-JAX reference (correctness check only)
# ----------------------------------------------------------------------------
def lstmnet_reference(x, lstm_params, fc_w, fc_b):
    B = x.shape[0]
    h_all = x
    for (w_ih, w_hh, b_ih, b_hh) in lstm_params:
        H = w_hh.shape[1]
        h = jnp.zeros((B, H), jnp.float32)
        c = jnp.zeros((B, H), jnp.float32)

        def step(carry, x_t, w_ih=w_ih, w_hh=w_hh, b_ih=b_ih, b_hh=b_hh, H=H):
            h, c = carry
            g = x_t @ w_ih.T + h @ w_hh.T + b_ih + b_hh
            i = jax.nn.sigmoid(g[:, 0 * H:1 * H])
            f = jax.nn.sigmoid(g[:, 1 * H:2 * H])
            gg = jnp.tanh(g[:, 2 * H:3 * H])
            o = jax.nn.sigmoid(g[:, 3 * H:4 * H])
            c = f * c + i * gg
            h = o * jnp.tanh(c)
            return (h, c), h

        (_, _), hs = lax.scan(step, (h, c), jnp.transpose(h_all, (1, 0, 2)))
        h_all = jnp.transpose(hs, (1, 0, 2))
    return jax.nn.sigmoid(h_all[:, -1, :] @ fc_w.T + fc_b)


# ----------------------------------------------------------------------------
# Deterministic parameter / input construction and test
# ----------------------------------------------------------------------------
def init_params(key, input_size, hidden_size, num_layers):
    k = 1.0 / jnp.sqrt(hidden_size)
    lstm_params = []
    for layer in range(num_layers):
        d_in = input_size if layer == 0 else hidden_size
        key, k1, k2, k3, k4 = jax.random.split(key, 5)
        w_ih = jax.random.uniform(k1, (4 * hidden_size, d_in), jnp.float32, -k, k)
        w_hh = jax.random.uniform(k2, (4 * hidden_size, hidden_size), jnp.float32, -k, k)
        b_ih = jax.random.uniform(k3, (4 * hidden_size,), jnp.float32, -k, k)
        b_hh = jax.random.uniform(k4, (4 * hidden_size,), jnp.float32, -k, k)
        lstm_params.append((w_ih, w_hh, b_ih, b_hh))
    key, k5, k6 = jax.random.split(key, 3)
    fc_w = jax.random.uniform(k5, (1, hidden_size), jnp.float32, -k, k)
    fc_b = jax.random.uniform(k6, (1,), jnp.float32, -k, k)
    return lstm_params, fc_w, fc_b


if __name__ == "__main__":
    B, T = 2, 8
    INPUT_SIZE, HIDDEN_SIZE, NUM_LAYERS = 16, 32, 2

    key = jax.random.PRNGKey(0)
    key, xkey = jax.random.split(key)
    x = jax.random.normal(xkey, (B, T, INPUT_SIZE), jnp.float32)

    lstm_params, fc_w, fc_b = init_params(key, INPUT_SIZE, HIDDEN_SIZE, NUM_LAYERS)

    out = lstmnet_forward(x, lstm_params, fc_w, fc_b)
    out = jax.block_until_ready(out)

    ref = lstmnet_reference(x, lstm_params, fc_w, fc_b)
    assert out.shape == (B, 1), out.shape
    assert jnp.allclose(out, ref, rtol=1e-5, atol=1e-5), (out, ref)

    print("KERNEL_OK")
</pallas_src>

<mosaic_0001>
module attributes {stable_mosaic.version = 11 : i64} {
  func.func @kernel(%arg0: memref<8x8x16xf32, #tpu.memory_space<vmem>>, %arg1: memref<16x128xf32, #tpu.memory_space<vmem>>, %arg2: memref<32x128xf32, #tpu.memory_space<vmem>>, %arg3: memref<1x128xf32, #tpu.memory_space<vmem>>, %arg4: memref<32x128xf32, #tpu.memory_space<vmem>>, %arg5: memref<32x128xf32, #tpu.memory_space<vmem>>, %arg6: memref<1x128xf32, #tpu.memory_space<vmem>>, %arg7: memref<1x32xf32, #tpu.memory_space<vmem>>, %arg8: memref<1x1xf32, #tpu.memory_space<vmem>>, %arg9: memref<8x1xf32, #tpu.memory_space<vmem>>, %arg10: memref<8x8x32xf32, #tpu.memory_space<vmem>>, %arg11: memref<8x8x128xf32, #tpu.memory_space<vmem>>) attributes {dimension_semantics = [], scalar_prefetch = 0 : i64, scratch_operands = 2 : i64, tpu.core_type = #tpu.core_type<tc>} {
    %0 = tpu.iota {dimensions = array<i32: 1>} : vector<8x128xi32>
    %c64_i32 = arith.constant 64 : i32
    %1 = vector.broadcast %c64_i32 : i32 to vector<8x128xi32>
    %2 = arith.cmpi sge, %0, %1 : vector<8x128xi32>
    %c96_i32 = arith.constant 96 : i32
    %3 = vector.broadcast %c96_i32 : i32 to vector<8x128xi32>
    %4 = arith.cmpi slt, %0, %3 : vector<8x128xi32>
    %5 = arith.andi %2, %4 : vector<8x128xi1>
    %c0 = arith.constant 0 : index
    %c0_0 = arith.constant 0 : index
    %6 = vector.load %arg1[%c0, %c0_0] : memref<16x128xf32, #tpu.memory_space<vmem>>, vector<16x128xf32>
    %c0_1 = arith.constant 0 : index
    %c0_2 = arith.constant 0 : index
    %7 = vector.load %arg2[%c0_1, %c0_2] : memref<32x128xf32, #tpu.memory_space<vmem>>, vector<32x128xf32>
    %c0_3 = arith.constant 0 : index
    %c0_4 = arith.constant 0 : index
    %8 = vector.load %arg3[%c0_3, %c0_4] : memref<1x128xf32, #tpu.memory_space<vmem>>, vector<1x128xf32>
    %c0_5 = arith.constant 0 : index
    %c0_6 = arith.constant 0 : index
    %c0_7 = arith.constant 0 : index
    %9 = vector.load %arg0[%c0_5, %c0_6, %c0_7] : memref<8x8x16xf32, #tpu.memory_space<vmem>>, vector<8x8x16xf32>
    %10 = vector.shape_cast %9 : vector<8x8x16xf32> to vector<64x16xf32>
    %cst = arith.constant dense<0.000000e+00> : vector<64x128xf32>
    %11 = tpu.matmul %10, %6, %cst {dimension_numbers = #tpu.dot_dimension_numbers<[1], [0], [0], [1], [0, 0, 1, 1], [], []>} : vector<64x16xf32>, vector<16x128xf32>, vector<64x128xf32> -> vector<64x128xf32>
    %12 = vector.broadcast %8 : vector<1x128xf32> to vector<64x128xf32>
    %13 = arith.addf %11, %12 : vector<64x128xf32>
    %14 = vector.shape_cast %13 : vector<64x128xf32> to vector<8x8x128xf32>
    %c0_8 = arith.constant 0 : index
    %c0_9 = arith.constant 0 : index
    %c0_10 = arith.constant 0 : index
    %15 = vector.load %arg11[%c0_8, %c0_9, %c0_10] : memref<8x8x128xf32, #tpu.memory_space<vmem>>, vector<8x8x128xf32>
    tpu.vector_store %arg11[%c0_8, %c0_9, %c0_10], %14 {strides = array<i32>} : memref<8x8x128xf32, #tpu.memory_space<vmem>>, vector<8x8x128xf32>,
    %cst_11 = arith.constant 0.000000e+00 : f32
    %16 = vector.broadcast %cst_11 : f32 to vector<8x32xf32>
    %cst_12 = arith.constant 0.000000e+00 : f32
    %17 = vector.broadcast %cst_12 : f32 to vector<8x32xf32>
    %c0_i32 = arith.constant 0 : i32
    %18 = arith.index_cast %c0_i32 : i32 to index
    %c0_13 = arith.constant 0 : index
    %c0_14 = arith.constant 0 : index
    %19 = vector.load %arg11[%18, %c0_13, %c0_14] : memref<8x8x128xf32, #tpu.memory_space<vmem>>, vector<1x8x128xf32>
    %20 = vector.shape_cast %19 : vector<1x8x128xf32> to vector<8x128xf32>
    %cst_15 = arith.constant dense<0.000000e+00> : vector<8x128xf32>
    %21 = tpu.matmul %16, %7, %cst_15 {dimension_numbers = #tpu.dot_dimension_numbers<[1], [0], [0], [1], [0, 0, 1, 1], [], []>} : vector<8x32xf32>, vector<32x128xf32>, vector<8x128xf32> -> vector<8x128xf32>
    %22 = arith.addf %20, %21 : vector<8x128xf32>
    %23 = math.tanh %22 : vector<8x128xf32>
    %24 = arith.negf %22 : vector<8x128xf32>
    %25 = math.exp %24 : vector<8x128xf32>
    %cst_16 = arith.constant 1.000000e+00 : f32
    %26 = vector.broadcast %cst_16 : f32 to vector<8x128xf32>
    %27 = arith.addf %26, %25 : vector<8x128xf32>
    %28 = arith.divf %26, %27 : vector<8x128xf32>
    %29 = arith.select %5, %23, %28 : vector<8x128xi1>, vector<8x128xf32>
    %30 = vector.extract_strided_slice %29 {offsets = [0, 0], sizes = [8, 32], strides = [1, 1]} : vector<8x128xf32> to vector<8x32xf32>
    %31 = vector.extract_strided_slice %29 {offsets = [0, 32], sizes = [8, 32], strides = [1, 1]} : vector<8x128xf32> to vector<8x32xf32>
    %32 = vector.extract_strided_slice %29 {offsets = [0, 64], sizes = [8, 32], strides = [1, 1]} : vector<8x128xf32> to vector<8x32xf32>
    %33 = vector.extract_strided_slice %29 {offsets = [0, 96], sizes = [8, 32], strides = [1, 1]} : vector<8x128xf32> to vector<8x32xf32>
    %34 = arith.mulf %31, %17 : vector<8x32xf32>
    %35 = arith.mulf %30, %32 : vector<8x32xf32>
    %36 = arith.addf %34, %35 : vector<8x32xf32>
    %37 = math.tanh %36 : vector<8x32xf32>
    %38 = arith.mulf %33, %37 : vector<8x32xf32>
    %39 = arith.index_cast %c0_i32 : i32 to index
    %c0_17 = arith.constant 0 : index
    %c0_18 = arith.constant 0 : index
    %40 = vector.load %arg10[%39, %c0_17, %c0_18] : memref<8x8x32xf32, #tpu.memory_space<vmem>>, vector<1x8x32xf32>
    %41 = vector.shape_cast %40 : vector<1x8x32xf32> to vector<8x32xf32>
    %42 = vector.shape_cast %38 : vector<8x32xf32> to vector<1x8x32xf32>
    tpu.vector_store %arg10[%39, %c0_17, %c0_18], %42 {strides = array<i32>} : memref<8x8x32xf32, #tpu.memory_space<vmem>>, vector<1x8x32xf32>,
    %c1_i32 = arith.constant 1 : i32
    %43 = arith.index_cast %c1_i32 : i32 to index
    %c0_19 = arith.constant 0 : index
    %c0_20 = arith.constant 0 : index
    %44 = vector.load %arg11[%43, %c0_19, %c0_20] : memref<8x8x128xf32, #tpu.memory_space<vmem>>, vector<1x8x128xf32>
    %45 = vector.shape_cast %44 : vector<1x8x128xf32> to vector<8x128xf32>
    %cst_21 = arith.constant dense<0.000000e+00> : vector<8x128xf32>
    %46 = tpu.matmul %38, %7, %cst_21 {dimension_numbers = #tpu.dot_dimension_numbers<[1], [0], [0], [1], [0, 0, 1, 1], [], []>} : vector<8x32xf32>, vector<32x128xf32>, vector<8x128xf32> -> vector<8x128xf32>
    %47 = arith.addf %45, %46 : vector<8x128xf32>
    %48 = math.tanh %47 : vector<8x128xf32>
    %49 = arith.negf %47 : vector<8x128xf32>
    %50 = math.exp %49 : vector<8x128xf32>
    %cst_22 = arith.constant 1.000000e+00 : f32
    %51 = vector.broadcast %cst_22 : f32 to vector<8x128xf32>
    %52 = arith.addf %51, %50 : vector<8x128xf32>
    %53 = arith.divf %51, %52 : vector<8x128xf32>
    %54 = arith.select %5, %48, %53 : vector<8x128xi1>, vector<8x128xf32>
    %55 = vector.extract_strided_slice %54 {offsets = [0, 0], sizes = [8, 32], strides = [1, 1]} : vector<8x128xf32> to vector<8x32xf32>
    %56 = vector.extract_strided_slice %54 {offsets = [0, 32], sizes = [8, 32], strides = [1, 1]} : vector<8x128xf32> to vector<8x32xf32>
    %57 = vector.extract_strided_slice %54 {offsets = [0, 64], sizes = [8, 32], strides = [1, 1]} : vector<8x128xf32> to vector<8x32xf32>
    %58 = vector.extract_strided_slice %54 {offsets = [0, 96], sizes = [8, 32], strides = [1, 1]} : vector<8x128xf32> to vector<8x32xf32>
    %59 = arith.mulf %56, %36 : vector<8x32xf32>
    %60 = arith.mulf %55, %57 : vector<8x32xf32>
    %61 = arith.addf %59, %60 : vector<8x32xf32>
    %62 = math.tanh %61 : vector<8x32xf32>
    %63 = arith.mulf %58, %62 : vector<8x32xf32>
    %64 = arith.index_cast %c1_i32 : i32 to index
    %c0_23 = arith.constant 0 : index
    %c0_24 = arith.constant 0 : index
    %65 = vector.load %arg10[%64, %c0_23, %c0_24] : memref<8x8x32xf32, #tpu.memory_space<vmem>>, vector<1x8x32xf32>
    %66 = vector.shape_cast %65 : vector<1x8x32xf32> to vector<8x32xf32>
    %67 = vector.shape_cast %63 : vector<8x32xf32> to vector<1x8x32xf32>
    tpu.vector_store %arg10[%64, %c0_23, %c0_24], %67 {strides = array<i32>} : memref<8x8x32xf32, #tpu.memory_space<vmem>>, vector<1x8x32xf32>,
    %c2_i32 = arith.constant 2 : i32
    %68 = arith.index_cast %c2_i32 : i32 to index
    %c0_25 = arith.constant 0 : index
    %c0_26 = arith.constant 0 : index
    %69 = vector.load %arg11[%68, %c0_25, %c0_26] : memref<8x8x128xf32, #tpu.memory_space<vmem>>, vector<1x8x128xf32>
    %70 = vector.shape_cast %69 : vector<1x8x128xf32> to vector<8x128xf32>
    %cst_27 = arith.constant dense<0.000000e+00> : vector<8x128xf32>
    %71 = tpu.matmul %63, %7, %cst_27 {dimension_numbers = #tpu.dot_dimension_numbers<[1], [0], [0], [1], [0, 0, 1, 1], [], []>} : vector<8x32xf32>, vector<32x128xf32>, vector<8x128xf32> -> vector<8x128xf32>
    %72 = arith.addf %70, %71 : vector<8x128xf32>
    %73 = math.tanh %72 : vector<8x128xf32>
    %74 = arith.negf %72 : vector<8x128xf32>
    %75 = math.exp %74 : vector<8x128xf32>
    %cst_28 = arith.constant 1.000000e+00 : f32
    %76 = vector.broadcast %cst_28 : f32 to vector<8x128xf32>
    %77 = arith.addf %76, %75 : vector<8x128xf32>
    %78 = arith.divf %76, %77 : vector<8x128xf32>
    %79 = arith.select %5, %73, %78 : vector<8x128xi1>, vector<8x128xf32>
    %80 = vector.extract_strided_slice %79 {offsets = [0, 0], sizes = [8, 32], strides = [1, 1]} : vector<8x128xf32> to vector<8x32xf32>
    %81 = vector.extract_strided_slice %79 {offsets = [0, 32], sizes = [8, 32], strides = [1, 1]} : vector<8x128xf32> to vector<8x32xf32>
    %82 = vector.extract_strided_slice %79 {offsets = [0, 64], sizes = [8, 32], strides = [1, 1]} : vector<8x128xf32> to vector<8x32xf32>
    %83 = vector.extract_strided_slice %79 {offsets = [0, 96], sizes = [8, 32], strides = [1, 1]} : vector<8x128xf32> to vector<8x32xf32>
    %84 = arith.mulf %81, %61 : vector<8x32xf32>
    %85 = arith.mulf %80, %82 : vector<8x32xf32>
    %86 = arith.addf %84, %85 : vector<8x32xf32>
    %87 = math.tanh %86 : vector<8x32xf32>
    %88 = arith.mulf %83, %87 : vector<8x32xf32>
    %89 = arith.index_cast %c2_i32 : i32 to index
    %c0_29 = arith.constant 0 : index
    %c0_30 = arith.constant 0 : index
    %90 = vector.load %arg10[%89, %c0_29, %c0_30] : memref<8x8x32xf32, #tpu.memory_space<vmem>>, vector<1x8x32xf32>
    %91 = vector.shape_cast %90 : vector<1x8x32xf32> to vector<8x32xf32>
    %92 = vector.shape_cast %88 : vector<8x32xf32> to vector<1x8x32xf32>
    tpu.vector_store %arg10[%89, %c0_29, %c0_30], %92 {strides = array<i32>} : memref<8x8x32xf32, #tpu.memory_space<vmem>>, vector<1x8x32xf32>,
    %c3_i32 = arith.constant 3 : i32
    %93 = arith.index_cast %c3_i32 : i32 to index
    %c0_31 = arith.constant 0 : index
    %c0_32 = arith.constant 0 : index
    %94 = vector.load %arg11[%93, %c0_31, %c0_32] : memref<8x8x128xf32, #tpu.memory_space<vmem>>, vector<1x8x128xf32>
    %95 = vector.shape_cast %94 : vector<1x8x128xf32> to vector<8x128xf32>
    %cst_33 = arith.constant dense<0.000000e+00> : vector<8x128xf32>
    %96 = tpu.matmul %88, %7, %cst_33 {dimension_numbers = #tpu.dot_dimension_numbers<[1], [0], [0], [1], [0, 0, 1, 1], [], []>} : vector<8x32xf32>, vector<32x128xf32>, vector<8x128xf32> -> vector<8x128xf32>
    %97 = arith.addf %95, %96 : vector<8x128xf32>
    %98 = math.tanh %97 : vector<8x128xf32>
    %99 = arith.negf %97 : vector<8x128xf32>
    %100 = math.exp %99 : vector<8x128xf32>
    %cst_34 = arith.constant 1.000000e+00 : f32
    %101 = vector.broadcast %cst_34 : f32 to vector<8x128xf32>
    %102 = arith.addf %101, %100 : vector<8x128xf32>
    %103 = arith.divf %101, %102 : vector<8x128xf32>
    %104 = arith.select %5, %98, %103 : vector<8x128xi1>, vector<8x128xf32>
    %105 = vector.extract_strided_slice %104 {offsets = [0, 0], sizes = [8, 32], strides = [1, 1]} : vector<8x128xf32> to vector<8x32xf32>
    %106 = vector.extract_strided_slice %104 {offsets = [0, 32], sizes = [8, 32], strides = [1, 1]} : vector<8x128xf32> to vector<8x32xf32>
    %107 = vector.extract_strided_slice %104 {offsets = [0, 64], sizes = [8, 32], strides = [1, 1]} : vector<8x128xf32> to vector<8x32xf32>
    %108 = vector.extract_strided_slice %104 {offsets = [0, 96], sizes = [8, 32], strides = [1, 1]} : vector<8x128xf32> to vector<8x32xf32>
    %109 = arith.mulf %106, %86 : vector<8x32xf32>
    %110 = arith.mulf %105, %107 : vector<8x32xf32>
    %111 = arith.addf %109, %110 : vector<8x32xf32>
    %112 = math.tanh %111 : vector<8x32xf32>
    %113 = arith.mulf %108, %112 : vector<8x32xf32>
    %114 = arith.index_cast %c3_i32 : i32 to index
    %c0_35 = arith.constant 0 : index
    %c0_36 = arith.constant 0 : index
    %115 = vector.load %arg10[%114, %c0_35, %c0_36] : memref<8x8x32xf32, #tpu.memory_space<vmem>>, vector<1x8x32xf32>
    %116 = vector.shape_cast %115 : vector<1x8x32xf32> to vector<8x32xf32>
    %117 = vector.shape_cast %113 : vector<8x32xf32> to vector<1x8x32xf32>
    tpu.vector_store %arg10[%114, %c0_35, %c0_36], %117 {strides = array<i32>} : memref<8x8x32xf32, #tpu.memory_space<vmem>>, vector<1x8x32xf32>,
    %c4_i32 = arith.constant 4 : i32
    %118 = arith.index_cast %c4_i32 : i32 to index
    %c0_37 = arith.constant 0 : index
    %c0_38 = arith.constant 0 : index
    %119 = vector.load %arg11[%118, %c0_37, %c0_38] : memref<8x8x128xf32, #tpu.memory_space<vmem>>, vector<1x8x128xf32>
    %120 = vector.shape_cast %119 : vector<1x8x128xf32> to vector<8x128xf32>
    %cst_39 = arith.constant dense<0.000000e+00> : vector<8x128xf32>
    %121 = tpu.matmul %113, %7, %cst_39 {dimension_numbers = #tpu.dot_dimension_numbers<[1], [0], [0], [1], [0, 0, 1, 1], [], []>} : vector<8x32xf32>, vector<32x128xf32>, vector<8x128xf32> -> vector<8x128xf32>
    %122 = arith.addf %120, %121 : vector<8x128xf32>
    %123 = math.tanh %122 : vector<8x128xf32>
    %124 = arith.negf %122 : vector<8x128xf32>
    %125 = math.exp %124 : vector<8x128xf32>
    %cst_40 = arith.constant 1.000000e+00 : f32
    %126 = vector.broadcast %cst_40 : f32 to vector<8x128xf32>
    %127 = arith.addf %126, %125 : vector<8x128xf32>
    %128 = arith.divf %126, %127 : vector<8x128xf32>
    %129 = arith.select %5, %123, %128 : vector<8x128xi1>, vector<8x128xf32>
    %130 = vector.extract_strided_slice %129 {offsets = [0, 0], sizes = [8, 32], strides = [1, 1]} : vector<8x128xf32> to vector<8x32xf32>
    %131 = vector.extract_strided_slice %129 {offsets = [0, 32], sizes = [8, 32], strides = [1, 1]} : vector<8x128xf32> to vector<8x32xf32>
    %132 = vector.extract_strided_slice %129 {offsets = [0, 64], sizes = [8, 32], strides = [1, 1]} : vector<8x128xf32> to vector<8x32xf32>
    %133 = vector.extract_strided_slice %129 {offsets = [0, 96], sizes = [8, 32], strides = [1, 1]} : vector<8x128xf32> to vector<8x32xf32>
    %134 = arith.mulf %131, %111 : vector<8x32xf32>
    %135 = arith.mulf %130, %132 : vector<8x32xf32>
    %136 = arith.addf %134, %135 : vector<8x32xf32>
    %137 = math.tanh %136 : vector<8x32xf32>
    %138 = arith.mulf %133, %137 : vector<8x32xf32>
    %139 = arith.index_cast %c4_i32 : i32 to index
    %c0_41 = arith.constant 0 : index
    %c0_42 = arith.constant 0 : index
    %140 = vector.load %arg10[%139, %c0_41, %c0_42] : memref<8x8x32xf32, #tpu.memory_space<vmem>>, vector<1x8x32xf32>
    %141 = vector.shape_cast %140 : vector<1x8x32xf32> to vector<8x32xf32>
    %142 = vector.shape_cast %138 : vector<8x32xf32> to vector<1x8x32xf32>
    tpu.vector_store %arg10[%139, %c0_41, %c0_42], %142 {strides = array<i32>} : memref<8x8x32xf32, #tpu.memory_space<vmem>>, vector<1x8x32xf32>,
    %c5_i32 = arith.constant 5 : i32
    %143 = arith.index_cast %c5_i32 : i32 to index
    %c0_43 = arith.constant 0 : index
    %c0_44 = arith.constant 0 : index
    %144 = vector.load %arg11[%143, %c0_43, %c0_44] : memref<8x8x128xf32, #tpu.memory_space<vmem>>, vector<1x8x128xf32>
    %145 = vector.shape_cast %144 : vector<1x8x128xf32> to vector<8x128xf32>
    %cst_45 = arith.constant dense<0.000000e+00> : vector<8x128xf32>
    %146 = tpu.matmul %138, %7, %cst_45 {dimension_numbers = #tpu.dot_dimension_numbers<[1], [0], [0], [1], [0, 0, 1, 1], [], []>} : vector<8x32xf32>, vector<32x128xf32>, vector<8x128xf32> -> vector<8x128xf32>
    %147 = arith.addf %145, %146 : vector<8x128xf32>
    %148 = math.tanh %147 : vector<8x128xf32>
    %149 = arith.negf %147 : vector<8x128xf32>
    %150 = math.exp %149 : vector<8x128xf32>
    %cst_46 = arith.constant 1.000000e+00 : f32
    %151 = vector.broadcast %cst_46 : f32 to vector<8x128xf32>
    %152 = arith.addf %151, %150 : vector<8x128xf32>
    %153 = arith.divf %151, %152 : vector<8x128xf32>
    %154 = arith.select %5, %148, %153 : vector<8x128xi1>, vector<8x128xf32>
    %155 = vector.extract_strided_slice %154 {offsets = [0, 0], sizes = [8, 32], strides = [1, 1]} : vector<8x128xf32> to vector<8x32xf32>
    %156 = vector.extract_strided_slice %154 {offsets = [0, 32], sizes = [8, 32], strides = [1, 1]} : vector<8x128xf32> to vector<8x32xf32>
    %157 = vector.extract_strided_slice %154 {offsets = [0, 64], sizes = [8, 32], strides = [1, 1]} : vector<8x128xf32> to vector<8x32xf32>
    %158 = vector.extract_strided_slice %154 {offsets = [0, 96], sizes = [8, 32], strides = [1, 1]} : vector<8x128xf32> to vector<8x32xf32>
    %159 = arith.mulf %156, %136 : vector<8x32xf32>
    %160 = arith.mulf %155, %157 : vector<8x32xf32>
    %161 = arith.addf %159, %160 : vector<8x32xf32>
    %162 = math.tanh %161 : vector<8x32xf32>
    %163 = arith.mulf %158, %162 : vector<8x32xf32>
    %164 = arith.index_cast %c5_i32 : i32 to index
    %c0_47 = arith.constant 0 : index
    %c0_48 = arith.constant 0 : index
    %165 = vector.load %arg10[%164, %c0_47, %c0_48] : memref<8x8x32xf32, #tpu.memory_space<vmem>>, vector<1x8x32xf32>
    %166 = vector.shape_cast %165 : vector<1x8x32xf32> to vector<8x32xf32>
    %167 = vector.shape_cast %163 : vector<8x32xf32> to vector<1x8x32xf32>
    tpu.vector_store %arg10[%164, %c0_47, %c0_48], %167 {strides = array<i32>} : memref<8x8x32xf32, #tpu.memory_space<vmem>>, vector<1x8x32xf32>,
    %c6_i32 = arith.constant 6 : i32
    %168 = arith.index_cast %c6_i32 : i32 to index
    %c0_49 = arith.constant 0 : index
    %c0_50 = arith.constant 0 : index
    %169 = vector.load %arg11[%168, %c0_49, %c0_50] : memref<8x8x128xf32, #tpu.memory_space<vmem>>, vector<1x8x128xf32>
    %170 = vector.shape_cast %169 : vector<1x8x128xf32> to vector<8x128xf32>
    %cst_51 = arith.constant dense<0.000000e+00> : vector<8x128xf32>
    %171 = tpu.matmul %163, %7, %cst_51 {dimension_numbers = #tpu.dot_dimension_numbers<[1], [0], [0], [1], [0, 0, 1, 1], [], []>} : vector<8x32xf32>, vector<32x128xf32>, vector<8x128xf32> -> vector<8x128xf32>
    %172 = arith.addf %170, %171 : vector<8x128xf32>
    %173 = math.tanh %172 : vector<8x128xf32>
    %174 = arith.negf %172 : vector<8x128xf32>
    %175 = math.exp %174 : vector<8x128xf32>
    %cst_52 = arith.constant 1.000000e+00 : f32
    %176 = vector.broadcast %cst_52 : f32 to vector<8x128xf32>
    %177 = arith.addf %176, %175 : vector<8x128xf32>
    %178 = arith.divf %176, %177 : vector<8x128xf32>
    %179 = arith.select %5, %173, %178 : vector<8x128xi1>, vector<8x128xf32>
    %180 = vector.extract_strided_slice %179 {offsets = [0, 0], sizes = [8, 32], strides = [1, 1]} : vector<8x128xf32> to vector<8x32xf32>
    %181 = vector.extract_strided_slice %179 {offsets = [0, 32], sizes = [8, 32], strides = [1, 1]} : vector<8x128xf32> to vector<8x32xf32>
    %182 = vector.extract_strided_slice %179 {offsets = [0, 64], sizes = [8, 32], strides = [1, 1]} : vector<8x128xf32> to vector<8x32xf32>
    %183 = vector.extract_strided_slice %179 {offsets = [0, 96], sizes = [8, 32], strides = [1, 1]} : vector<8x128xf32> to vector<8x32xf32>
    %184 = arith.mulf %181, %161 : vector<8x32xf32>
    %185 = arith.mulf %180, %182 : vector<8x32xf32>
    %186 = arith.addf %184, %185 : vector<8x32xf32>
    %187 = math.tanh %186 : vector<8x32xf32>
    %188 = arith.mulf %183, %187 : vector<8x32xf32>
    %189 = arith.index_cast %c6_i32 : i32 to index
    %c0_53 = arith.constant 0 : index
    %c0_54 = arith.constant 0 : index
    %190 = vector.load %arg10[%189, %c0_53, %c0_54] : memref<8x8x32xf32, #tpu.memory_space<vmem>>, vector<1x8x32xf32>
    %191 = vector.shape_cast %190 : vector<1x8x32xf32> to vector<8x32xf32>
    %192 = vector.shape_cast %188 : vector<8x32xf32> to vector<1x8x32xf32>
    tpu.vector_store %arg10[%189, %c0_53, %c0_54], %192 {strides = array<i32>} : memref<8x8x32xf32, #tpu.memory_space<vmem>>, vector<1x8x32xf32>,
    %c7_i32 = arith.constant 7 : i32
    %193 = arith.index_cast %c7_i32 : i32 to index
    %c0_55 = arith.constant 0 : index
    %c0_56 = arith.constant 0 : index
    %194 = vector.load %arg11[%193, %c0_55, %c0_56] : memref<8x8x128xf32, #tpu.memory_space<vmem>>, vector<1x8x128xf32>
    %195 = vector.shape_cast %194 : vector<1x8x128xf32> to vector<8x128xf32>
    %cst_57 = arith.constant dense<0.000000e+00> : vector<8x128xf32>
    %196 = tpu.matmul %188, %7, %cst_57 {dimension_numbers = #tpu.dot_dimension_numbers<[1], [0], [0], [1], [0, 0, 1, 1], [], []>} : vector<8x32xf32>, vector<32x128xf32>, vector<8x128xf32> -> vector<8x128xf32>
    %197 = arith.addf %195, %196 : vector<8x128xf32>
    %198 = math.tanh %197 : vector<8x128xf32>
    %199 = arith.negf %197 : vector<8x128xf32>
    %200 = math.exp %199 : vector<8x128xf32>
    %cst_58 = arith.constant 1.000000e+00 : f32
    %201 = vector.broadcast %cst_58 : f32 to vector<8x128xf32>
    %202 = arith.addf %201, %200 : vector<8x128xf32>
    %203 = arith.divf %201, %202 : vector<8x128xf32>
    %204 = arith.select %5, %198, %203 : vector<8x128xi1>, vector<8x128xf32>
    %205 = vector.extract_strided_slice %204 {offsets = [0, 0], sizes = [8, 32], strides = [1, 1]} : vector<8x128xf32> to vector<8x32xf32>
    %206 = vector.extract_strided_slice %204 {offsets = [0, 32], sizes = [8, 32], strides = [1, 1]} : vector<8x128xf32> to vector<8x32xf32>
    %207 = vector.extract_strided_slice %204 {offsets = [0, 64], sizes = [8, 32], strides = [1, 1]} : vector<8x128xf32> to vector<8x32xf32>
    %208 = vector.extract_strided_slice %204 {offsets = [0, 96], sizes = [8, 32], strides = [1, 1]} : vector<8x128xf32> to vector<8x32xf32>
    %209 = arith.mulf %206, %186 : vector<8x32xf32>
    %210 = arith.mulf %205, %207 : vector<8x32xf32>
    %211 = arith.addf %209, %210 : vector<8x32xf32>
    %212 = math.tanh %211 : vector<8x32xf32>
    %213 = arith.mulf %208, %212 : vector<8x32xf32>
    %214 = arith.index_cast %c7_i32 : i32 to index
    %c0_59 = arith.constant 0 : index
    %c0_60 = arith.constant 0 : index
    %215 = vector.load %arg10[%214, %c0_59, %c0_60] : memref<8x8x32xf32, #tpu.memory_space<vmem>>, vector<1x8x32xf32>
    %216 = vector.shape_cast %215 : vector<1x8x32xf32> to vector<8x32xf32>
    %217 = vector.shape_cast %213 : vector<8x32xf32> to vector<1x8x32xf32>
    tpu.vector_store %arg10[%214, %c0_59, %c0_60], %217 {strides = array<i32>} : memref<8x8x32xf32, #tpu.memory_space<vmem>>, vector<1x8x32xf32>,
    %c8_i32 = arith.constant 8 : i32
    %c0_61 = arith.constant 0 : index
    %c0_62 = arith.constant 0 : index
    %218 = vector.load %arg4[%c0_61, %c0_62] : memref<32x128xf32, #tpu.memory_space<vmem>>, vector<32x128xf32>
    %c0_63 = arith.constant 0 : index
    %c0_64 = arith.constant 0 : index
    %219 = vector.load %arg5[%c0_63, %c0_64] : memref<32x128xf32, #tpu.memory_space<vmem>>, vector<32x128xf32>
    %c0_65 = arith.constant 0 : index
    %c0_66 = arith.constant 0 : index
    %220 = vector.load %arg6[%c0_65, %c0_66] : memref<1x128xf32, #tpu.memory_space<vmem>>, vector<1x128xf32>
    %c0_67 = arith.constant 0 : index
    %c0_68 = arith.constant 0 : index
    %c0_69 = arith.constant 0 : index
    %221 = vector.load %arg10[%c0_67, %c0_68, %c0_69] : memref<8x8x32xf32, #tpu.memory_space<vmem>>, vector<8x8x32xf32>
    %222 = vector.shape_cast %221 : vector<8x8x32xf32> to vector<64x32xf32>
    %cst_70 = arith.constant dense<0.000000e+00> : vector<64x128xf32>
    %223 = tpu.matmul %222, %218, %cst_70 {dimension_numbers = #tpu.dot_dimension_numbers<[1], [0], [0], [1], [0, 0, 1, 1], [], []>} : vector<64x32xf32>, vector<32x128xf32>, vector<64x128xf32> -> vector<64x128xf32>
    %224 = vector.broadcast %220 : vector<1x128xf32> to vector<64x128xf32>
    %225 = arith.addf %223, %224 : vector<64x128xf32>
    %226 = vector.shape_cast %225 : vector<64x128xf32> to vector<8x8x128xf32>
    %c0_71 = arith.constant 0 : index
    %c0_72 = arith.constant 0 : index
    %c0_73 = arith.constant 0 : index
    %227 = vector.load %arg11[%c0_71, %c0_72, %c0_73] : memref<8x8x128xf32, #tpu.memory_space<vmem>>, vector<8x8x128xf32>
    tpu.vector_store %arg11[%c0_71, %c0_72, %c0_73], %226 {strides = array<i32>} : memref<8x8x128xf32, #tpu.memory_space<vmem>>, vector<8x8x128xf32>,
    %cst_74 = arith.constant 0.000000e+00 : f32
    %228 = vector.broadcast %cst_74 : f32 to vector<8x32xf32>
    %cst_75 = arith.constant 0.000000e+00 : f32
    %229 = vector.broadcast %cst_75 : f32 to vector<8x32xf32>
    %c0_i32_76 = arith.constant 0 : i32
    %230 = arith.index_cast %c0_i32_76 : i32 to index
    %c0_77 = arith.constant 0 : index
    %c0_78 = arith.constant 0 : index
    %231 = vector.load %arg11[%230, %c0_77, %c0_78] : memref<8x8x128xf32, #tpu.memory_space<vmem>>, vector<1x8x128xf32>
    %232 = vector.shape_cast %231 : vector<1x8x128xf32> to vector<8x128xf32>
    %cst_79 = arith.constant dense<0.000000e+00> : vector<8x128xf32>
    %233 = tpu.matmul %228, %219, %cst_79 {dimension_numbers = #tpu.dot_dimension_numbers<[1], [0], [0], [1], [0, 0, 1, 1], [], []>} : vector<8x32xf32>, vector<32x128xf32>, vector<8x128xf32> -> vector<8x128xf32>
    %234 = arith.addf %232, %233 : vector<8x128xf32>
    %235 = math.tanh %234 : vector<8x128xf32>
    %236 = arith.negf %234 : vector<8x128xf32>
    %237 = math.exp %236 : vector<8x128xf32>
    %cst_80 = arith.constant 1.000000e+00 : f32
    %238 = vector.broadcast %cst_80 : f32 to vector<8x128xf32>
    %239 = arith.addf %238, %237 : vector<8x128xf32>
    %240 = arith.divf %238, %239 : vector<8x128xf32>
    %241 = arith.select %5, %235, %240 : vector<8x128xi1>, vector<8x128xf32>
    %242 = vector.extract_strided_slice %241 {offsets = [0, 0], sizes = [8, 32], strides = [1, 1]} : vector<8x128xf32> to vector<8x32xf32>
    %243 = vector.extract_strided_slice %241 {offsets = [0, 32], sizes = [8, 32], strides = [1, 1]} : vector<8x128xf32> to vector<8x32xf32>
    %244 = vector.extract_strided_slice %241 {offsets = [0, 64], sizes = [8, 32], strides = [1, 1]} : vector<8x128xf32> to vector<8x32xf32>
    %245 = vector.extract_strided_slice %241 {offsets = [0, 96], sizes = [8, 32], strides = [1, 1]} : vector<8x128xf32> to vector<8x32xf32>
    %246 = arith.mulf %243, %229 : vector<8x32xf32>
    %247 = arith.mulf %242, %244 : vector<8x32xf32>
    %248 = arith.addf %246, %247 : vector<8x32xf32>
    %249 = math.tanh %248 : vector<8x32xf32>
    %250 = arith.mulf %245, %249 : vector<8x32xf32>
    %c1_i32_81 = arith.constant 1 : i32
    %251 = arith.index_cast %c1_i32_81 : i32 to index
    %c0_82 = arith.constant 0 : index
    %c0_83 = arith.constant 0 : index
    %252 = vector.load %arg11[%251, %c0_82, %c0_83] : memref<8x8x128xf32, #tpu.memory_space<vmem>>, vector<1x8x128xf32>
    %253 = vector.shape_cast %252 : vector<1x8x128xf32> to vector<8x128xf32>
    %cst_84 = arith.constant dense<0.000000e+00> : vector<8x128xf32>
    %254 = tpu.matmul %250, %219, %cst_84 {dimension_numbers = #tpu.dot_dimension_numbers<[1], [0], [0], [1], [0, 0, 1, 1], [], []>} : vector<8x32xf32>, vector<32x128xf32>, vector<8x128xf32> -> vector<8x128xf32>
    %255 = arith.addf %253, %254 : vector<8x128xf32>
    %256 = math.tanh %255 : vector<8x128xf32>
    %257 = arith.negf %255 : vector<8x128xf32>
    %258 = math.exp %257 : vector<8x128xf32>
    %cst_85 = arith.constant 1.000000e+00 : f32
    %259 = vector.broadcast %cst_85 : f32 to vector<8x128xf32>
    %260 = arith.addf %259, %258 : vector<8x128xf32>
    %261 = arith.divf %259, %260 : vector<8x128xf32>
    %262 = arith.select %5, %256, %261 : vector<8x128xi1>, vector<8x128xf32>
    %263 = vector.extract_strided_slice %262 {offsets = [0, 0], sizes = [8, 32], strides = [1, 1]} : vector<8x128xf32> to vector<8x32xf32>
    %264 = vector.extract_strided_slice %262 {offsets = [0, 32], sizes = [8, 32], strides = [1, 1]} : vector<8x128xf32> to vector<8x32xf32>
    %265 = vector.extract_strided_slice %262 {offsets = [0, 64], sizes = [8, 32], strides = [1, 1]} : vector<8x128xf32> to vector<8x32xf32>
    %266 = vector.extract_strided_slice %262 {offsets = [0, 96], sizes = [8, 32], strides = [1, 1]} : vector<8x128xf32> to vector<8x32xf32>
    %267 = arith.mulf %264, %248 : vector<8x32xf32>
    %268 = arith.mulf %263, %265 : vector<8x32xf32>
    %269 = arith.addf %267, %268 : vector<8x32xf32>
    %270 = math.tanh %269 : vector<8x32xf32>
    %271 = arith.mulf %266, %270 : vector<8x32xf32>
    %c2_i32_86 = arith.constant 2 : i32
    %272 = arith.index_cast %c2_i32_86 : i32 to index
    %c0_87 = arith.constant 0 : index
    %c0_88 = arith.constant 0 : index
    %273 = vector.load %arg11[%272, %c0_87, %c0_88] : memref<8x8x128xf32, #tpu.memory_space<vmem>>, vector<1x8x128xf32>
    %274 = vector.shape_cast %273 : vector<1x8x128xf32> to vector<8x128xf32>
    %cst_89 = arith.constant dense<0.000000e+00> : vector<8x128xf32>
    %275 = tpu.matmul %271, %219, %cst_89 {dimension_numbers = #tpu.dot_dimension_numbers<[1], [0], [0], [1], [0, 0, 1, 1], [], []>} : vector<8x32xf32>, vector<32x128xf32>, vector<8x128xf32> -> vector<8x128xf32>
    %276 = arith.addf %274, %275 : vector<8x128xf32>
    %277 = math.tanh %276 : vector<8x128xf32>
    %278 = arith.negf %276 : vector<8x128xf32>
    %279 = math.exp %278 : vector<8x128xf32>
    %cst_90 = arith.constant 1.000000e+00 : f32
    %280 = vector.broadcast %cst_90 : f32 to vector<8x128xf32>
    %281 = arith.addf %280, %279 : vector<8x128xf32>
    %282 = arith.divf %280, %281 : vector<8x128xf32>
    %283 = arith.select %5, %277, %282 : vector<8x128xi1>, vector<8x128xf32>
    %284 = vector.extract_strided_slice %283 {offsets = [0, 0], sizes = [8, 32], strides = [1, 1]} : vector<8x128xf32> to vector<8x32xf32>
    %285 = vector.extract_strided_slice %283 {offsets = [0, 32], sizes = [8, 32], strides = [1, 1]} : vector<8x128xf32> to vector<8x32xf32>
    %286 = vector.extract_strided_slice %283 {offsets = [0, 64], sizes = [8, 32], strides = [1, 1]} : vector<8x128xf32> to vector<8x32xf32>
    %287 = vector.extract_strided_slice %283 {offsets = [0, 96], sizes = [8, 32], strides = [1, 1]} : vector<8x128xf32> to vector<8x32xf32>
    %288 = arith.mulf %285, %269 : vector<8x32xf32>
    %289 = arith.mulf %284, %286 : vector<8x32xf32>
    %290 = arith.addf %288, %289 : vector<8x32xf32>
    %291 = math.tanh %290 : vector<8x32xf32>
    %292 = arith.mulf %287, %291 : vector<8x32xf32>
    %c3_i32_91 = arith.constant 3 : i32
    %293 = arith.index_cast %c3_i32_91 : i32 to index
    %c0_92 = arith.constant 0 : index
    %c0_93 = arith.constant 0 : index
    %294 = vector.load %arg11[%293, %c0_92, %c0_93] : memref<8x8x128xf32, #tpu.memory_space<vmem>>, vector<1x8x128xf32>
    %295 = vector.shape_cast %294 : vector<1x8x128xf32> to vector<8x128xf32>
    %cst_94 = arith.constant dense<0.000000e+00> : vector<8x128xf32>
    %296 = tpu.matmul %292, %219, %cst_94 {dimension_numbers = #tpu.dot_dimension_numbers<[1], [0], [0], [1], [0, 0, 1, 1], [], []>} : vector<8x32xf32>, vector<32x128xf32>, vector<8x128xf32> -> vector<8x128xf32>
    %297 = arith.addf %295, %296 : vector<8x128xf32>
    %298 = math.tanh %297 : vector<8x128xf32>
    %299 = arith.negf %297 : vector<8x128xf32>
    %300 = math.exp %299 : vector<8x128xf32>
    %cst_95 = arith.constant 1.000000e+00 : f32
    %301 = vector.broadcast %cst_95 : f32 to vector<8x128xf32>
    %302 = arith.addf %301, %300 : vector<8x128xf32>
    %303 = arith.divf %301, %302 : vector<8x128xf32>
    %304 = arith.select %5, %298, %303 : vector<8x128xi1>, vector<8x128xf32>
    %305 = vector.extract_strided_slice %304 {offsets = [0, 0], sizes = [8, 32], strides = [1, 1]} : vector<8x128xf32> to vector<8x32xf32>
    %306 = vector.extract_strided_slice %304 {offsets = [0, 32], sizes = [8, 32], strides = [1, 1]} : vector<8x128xf32> to vector<8x32xf32>
    %307 = vector.extract_strided_slice %304 {offsets = [0, 64], sizes = [8, 32], strides = [1, 1]} : vector<8x128xf32> to vector<8x32xf32>
    %308 = vector.extract_strided_slice %304 {offsets = [0, 96], sizes = [8, 32], strides = [1, 1]} : vector<8x128xf32> to vector<8x32xf32>
    %309 = arith.mulf %306, %290 : vector<8x32xf32>
    %310 = arith.mulf %305, %307 : vector<8x32xf32>
    %311 = arith.addf %309, %310 : vector<8x32xf32>
    %312 = math.tanh %311 : vector<8x32xf32>
    %313 = arith.mulf %308, %312 : vector<8x32xf32>
    %c4_i32_96 = arith.constant 4 : i32
    %314 = arith.index_cast %c4_i32_96 : i32 to index
    %c0_97 = arith.constant 0 : index
    %c0_98 = arith.constant 0 : index
    %315 = vector.load %arg11[%314, %c0_97, %c0_98] : memref<8x8x128xf32, #tpu.memory_space<vmem>>, vector<1x8x128xf32>
    %316 = vector.shape_cast %315 : vector<1x8x128xf32> to vector<8x128xf32>
    %cst_99 = arith.constant dense<0.000000e+00> : vector<8x128xf32>
    %317 = tpu.matmul %313, %219, %cst_99 {dimension_numbers = #tpu.dot_dimension_numbers<[1], [0], [0], [1], [0, 0, 1, 1], [], []>} : vector<8x32xf32>, vector<32x128xf32>, vector<8x128xf32> -> vector<8x128xf32>
    %318 = arith.addf %316, %317 : vector<8x128xf32>
    %319 = math.tanh %318 : vector<8x128xf32>
    %320 = arith.negf %318 : vector<8x128xf32>
    %321 = math.exp %320 : vector<8x128xf32>
    %cst_100 = arith.constant 1.000000e+00 : f32
    %322 = vector.broadcast %cst_100 : f32 to vector<8x128xf32>
    %323 = arith.addf %322, %321 : vector<8x128xf32>
    %324 = arith.divf %322, %323 : vector<8x128xf32>
    %325 = arith.select %5, %319, %324 : vector<8x128xi1>, vector<8x128xf32>
    %326 = vector.extract_strided_slice %325 {offsets = [0, 0], sizes = [8, 32], strides = [1, 1]} : vector<8x128xf32> to vector<8x32xf32>
    %327 = vector.extract_strided_slice %325 {offsets = [0, 32], sizes = [8, 32], strides = [1, 1]} : vector<8x128xf32> to vector<8x32xf32>
    %328 = vector.extract_strided_slice %325 {offsets = [0, 64], sizes = [8, 32], strides = [1, 1]} : vector<8x128xf32> to vector<8x32xf32>
    %329 = vector.extract_strided_slice %325 {offsets = [0, 96], sizes = [8, 32], strides = [1, 1]} : vector<8x128xf32> to vector<8x32xf32>
    %330 = arith.mulf %327, %311 : vector<8x32xf32>
    %331 = arith.mulf %326, %328 : vector<8x32xf32>
    %332 = arith.addf %330, %331 : vector<8x32xf32>
    %333 = math.tanh %332 : vector<8x32xf32>
    %334 = arith.mulf %329, %333 : vector<8x32xf32>
    %c5_i32_101 = arith.constant 5 : i32
    %335 = arith.index_cast %c5_i32_101 : i32 to index
    %c0_102 = arith.constant 0 : index
    %c0_103 = arith.constant 0 : index
    %336 = vector.load %arg11[%335, %c0_102, %c0_103] : memref<8x8x128xf32, #tpu.memory_space<vmem>>, vector<1x8x128xf32>
    %337 = vector.shape_cast %336 : vector<1x8x128xf32> to vector<8x128xf32>
    %cst_104 = arith.constant dense<0.000000e+00> : vector<8x128xf32>
    %338 = tpu.matmul %334, %219, %cst_104 {dimension_numbers = #tpu.dot_dimension_numbers<[1], [0], [0], [1], [0, 0, 1, 1], [], []>} : vector<8x32xf32>, vector<32x128xf32>, vector<8x128xf32> -> vector<8x128xf32>
    %339 = arith.addf %337, %338 : vector<8x128xf32>
    %340 = math.tanh %339 : vector<8x128xf32>
    %341 = arith.negf %339 : vector<8x128xf32>
    %342 = math.exp %341 : vector<8x128xf32>
    %cst_105 = arith.constant 1.000000e+00 : f32
    %343 = vector.broadcast %cst_105 : f32 to vector<8x128xf32>
    %344 = arith.addf %343, %342 : vector<8x128xf32>
    %345 = arith.divf %343, %344 : vector<8x128xf32>
    %346 = arith.select %5, %340, %345 : vector<8x128xi1>, vector<8x128xf32>
    %347 = vector.extract_strided_slice %346 {offsets = [0, 0], sizes = [8, 32], strides = [1, 1]} : vector<8x128xf32> to vector<8x32xf32>
    %348 = vector.extract_strided_slice %346 {offsets = [0, 32], sizes = [8, 32], strides = [1, 1]} : vector<8x128xf32> to vector<8x32xf32>
    %349 = vector.extract_strided_slice %346 {offsets = [0, 64], sizes = [8, 32], strides = [1, 1]} : vector<8x128xf32> to vector<8x32xf32>
    %350 = vector.extract_strided_slice %346 {offsets = [0, 96], sizes = [8, 32], strides = [1, 1]} : vector<8x128xf32> to vector<8x32xf32>
    %351 = arith.mulf %348, %332 : vector<8x32xf32>
    %352 = arith.mulf %347, %349 : vector<8x32xf32>
    %353 = arith.addf %351, %352 : vector<8x32xf32>
    %354 = math.tanh %353 : vector<8x32xf32>
    %355 = arith.mulf %350, %354 : vector<8x32xf32>
    %c6_i32_106 = arith.constant 6 : i32
    %356 = arith.index_cast %c6_i32_106 : i32 to index
    %c0_107 = arith.constant 0 : index
    %c0_108 = arith.constant 0 : index
    %357 = vector.load %arg11[%356, %c0_107, %c0_108] : memref<8x8x128xf32, #tpu.memory_space<vmem>>, vector<1x8x128xf32>
    %358 = vector.shape_cast %357 : vector<1x8x128xf32> to vector<8x128xf32>
    %cst_109 = arith.constant dense<0.000000e+00> : vector<8x128xf32>
    %359 = tpu.matmul %355, %219, %cst_109 {dimension_numbers = #tpu.dot_dimension_numbers<[1], [0], [0], [1], [0, 0, 1, 1], [], []>} : vector<8x32xf32>, vector<32x128xf32>, vector<8x128xf32> -> vector<8x128xf32>
    %360 = arith.addf %358, %359 : vector<8x128xf32>
    %361 = math.tanh %360 : vector<8x128xf32>
    %362 = arith.negf %360 : vector<8x128xf32>
    %363 = math.exp %362 : vector<8x128xf32>
    %cst_110 = arith.constant 1.000000e+00 : f32
    %364 = vector.broadcast %cst_110 : f32 to vector<8x128xf32>
    %365 = arith.addf %364, %363 : vector<8x128xf32>
    %366 = arith.divf %364, %365 : vector<8x128xf32>
    %367 = arith.select %5, %361, %366 : vector<8x128xi1>, vector<8x128xf32>
    %368 = vector.extract_strided_slice %367 {offsets = [0, 0], sizes = [8, 32], strides = [1, 1]} : vector<8x128xf32> to vector<8x32xf32>
    %369 = vector.extract_strided_slice %367 {offsets = [0, 32], sizes = [8, 32], strides = [1, 1]} : vector<8x128xf32> to vector<8x32xf32>
    %370 = vector.extract_strided_slice %367 {offsets = [0, 64], sizes = [8, 32], strides = [1, 1]} : vector<8x128xf32> to vector<8x32xf32>
    %371 = vector.extract_strided_slice %367 {offsets = [0, 96], sizes = [8, 32], strides = [1, 1]} : vector<8x128xf32> to vector<8x32xf32>
    %372 = arith.mulf %369, %353 : vector<8x32xf32>
    %373 = arith.mulf %368, %370 : vector<8x32xf32>
    %374 = arith.addf %372, %373 : vector<8x32xf32>
    %375 = math.tanh %374 : vector<8x32xf32>
    %376 = arith.mulf %371, %375 : vector<8x32xf32>
    %c7_i32_111 = arith.constant 7 : i32
    %377 = arith.index_cast %c7_i32_111 : i32 to index
    %c0_112 = arith.constant 0 : index
    %c0_113 = arith.constant 0 : index
    %378 = vector.load %arg11[%377, %c0_112, %c0_113] : memref<8x8x128xf32, #tpu.memory_space<vmem>>, vector<1x8x128xf32>
    %379 = vector.shape_cast %378 : vector<1x8x128xf32> to vector<8x128xf32>
    %cst_114 = arith.constant dense<0.000000e+00> : vector<8x128xf32>
    %380 = tpu.matmul %376, %219, %cst_114 {dimension_numbers = #tpu.dot_dimension_numbers<[1], [0], [0], [1], [0, 0, 1, 1], [], []>} : vector<8x32xf32>, vector<32x128xf32>, vector<8x128xf32> -> vector<8x128xf32>
    %381 = arith.addf %379, %380 : vector<8x128xf32>
    %382 = math.tanh %381 : vector<8x128xf32>
    %383 = arith.negf %381 : vector<8x128xf32>
    %384 = math.exp %383 : vector<8x128xf32>
    %cst_115 = arith.constant 1.000000e+00 : f32
    %385 = vector.broadcast %cst_115 : f32 to vector<8x128xf32>
    %386 = arith.addf %385, %384 : vector<8x128xf32>
    %387 = arith.divf %385, %386 : vector<8x128xf32>
    %388 = arith.select %5, %382, %387 : vector<8x128xi1>, vector<8x128xf32>
    %389 = vector.extract_strided_slice %388 {offsets = [0, 0], sizes = [8, 32], strides = [1, 1]} : vector<8x128xf32> to vector<8x32xf32>
    %390 = vector.extract_strided_slice %388 {offsets = [0, 32], sizes = [8, 32], strides = [1, 1]} : vector<8x128xf32> to vector<8x32xf32>
    %391 = vector.extract_strided_slice %388 {offsets = [0, 64], sizes = [8, 32], strides = [1, 1]} : vector<8x128xf32> to vector<8x32xf32>
    %392 = vector.extract_strided_slice %388 {offsets = [0, 96], sizes = [8, 32], strides = [1, 1]} : vector<8x128xf32> to vector<8x32xf32>
    %393 = arith.mulf %390, %374 : vector<8x32xf32>
    %394 = arith.mulf %389, %391 : vector<8x32xf32>
    %395 = arith.addf %393, %394 : vector<8x32xf32>
    %396 = math.tanh %395 : vector<8x32xf32>
    %397 = arith.mulf %392, %396 : vector<8x32xf32>
    %c8_i32_116 = arith.constant 8 : i32
    %c0_117 = arith.constant 0 : index
    %c0_118 = arith.constant 0 : index
    %398 = vector.load %arg7[%c0_117, %c0_118] : memref<1x32xf32, #tpu.memory_space<vmem>>, vector<1x32xf32>
    %399 = vector.broadcast %398 : vector<1x32xf32> to vector<8x32xf32>
    %400 = arith.mulf %397, %399 : vector<8x32xf32>
    %cst_119 = arith.constant dense<0.000000e+00> : vector<8xf32>
    %401 = vector.multi_reduction <add>, %400, %cst_119 [1] : vector<8x32xf32> to vector<8xf32>
    %402 = vector.shape_cast %401 : vector<8xf32> to vector<8x1xf32>
    %c0_120 = arith.constant 0 : index
    %c0_121 = arith.constant 0 : index
    %403 = vector.load %arg8[%c0_120, %c0_121] : memref<1x1xf32, #tpu.memory_space<vmem>>, vector<1x1xf32>
    %404 = vector.broadcast %403 : vector<1x1xf32> to vector<8x1xf32>
    %405 = arith.addf %402, %404 : vector<8x1xf32>
    %406 = arith.negf %405 : vector<8x1xf32>
    %407 = math.exp %406 : vector<8x1xf32>
    %cst_122 = arith.constant 1.000000e+00 : f32
    %408 = vector.broadcast %cst_122 : f32 to vector<8x1xf32>
    %409 = arith.addf %408, %407 : vector<8x1xf32>
    %410 = arith.divf %408, %409 : vector<8x1xf32>
    %c0_123 = arith.constant 0 : index
    %c0_124 = arith.constant 0 : index
    %411 = vector.load %arg9[%c0_123, %c0_124] : memref<8x1xf32, #tpu.memory_space<vmem>>, vector<8x1xf32>
    tpu.vector_store %arg9[%c0_123, %c0_124], %410 {strides = array<i32>} : memref<8x1xf32, #tpu.memory_space<vmem>>, vector<8x1xf32>,
    return
  }
}

</mosaic_0001>

<llo_original>
// kernel: tpu_custom_call.1
$region0: #{tpu_custom_call.1}
  #allocation0 [shape = 'u32[]', space=smem, size = 0x4, offset = 0x4, fixed_abs, tag = 'smem constant byte address 0x4 - core index']
  #allocation1 [shape = 'u32[144,128]{1,0:T(1,128)}', space=vmem, size = 0x12000, scoped, tag = 'internal scratch']
  #allocation2 [shape = 'f32[8,8,32]{2,1,0:T(8,128)}', space=vmem, size = 0x8000, scoped, tag = 'scratch operand']
  #allocation3 [shape = 'f32[8,8,128]{2,1,0:T(8,128)}', space=vmem, size = 0x8000, scoped, tag = 'scratch operand']
  #allocation4 [shape = 'f32[1,1]{1,0:T(1,128)S(1)}', space=vmem, size = 0x200, scoped, tag = 'scoped memory for tpu_custom_call.1']
  %s0 = inlined_call_operand.hbm [shape: f32[8,8,16], index: 0, kind: input, shape index: {}]
  %s1 = inlined_call_operand.hbm [shape: f32[16,128], index: 1, kind: input, shape index: {}]
  %s2 = inlined_call_operand.hbm [shape: f32[32,128], index: 2, kind: input, shape index: {}]
  %s3 = inlined_call_operand.vmem [shape: f32[1,128], index: 3, kind: input, shape index: {}]
  %s4 = inlined_call_operand.hbm [shape: f32[32,128], index: 4, kind: input, shape index: {}]
  %s5 = inlined_call_operand.hbm [shape: f32[32,128], index: 5, kind: input, shape index: {}]
  %s6 = inlined_call_operand.vmem [shape: f32[1,128], index: 6, kind: input, shape index: {}]
  %s7 = inlined_call_operand.vmem [shape: f32[1,32], index: 7, kind: input, shape index: {}]
  %s8 = inlined_call_operand.<no memory space> [shape: f32[1,1], index: 8, kind: input, shape index: {}]
  %s9 = inlined_call_operand.vmem [shape: f32[8,1], index: 9, kind: output, shape index: {}]
  %s10 = sld [smem:[#allocation0]]
  $region66: #{tpu_custom_call.1} parent=0
    _
  %s12 = ssub.s32 1, %s10
  %s13 = scalar_select 0, %s12, %s10
  %v14 = vstv %s8
  %15 = vst [vmem:[#allocation4] sm:$0x1] %v14
  $region1: #{tpu_custom_call.1} parent=0
    #allocation5 [shape = 'u8[32768]{0}', space=vmem, size = 0x8000, scoped, tag = 'input window, operand 0, single buffered']
    #allocation6 [shape = 's32[1]{0}', space=sflag, size = 0x4, scoped, tag = 'scoped memory for tpu_custom_call.1']
    #allocation7 [shape = 'u8[8192]{0}', space=vmem, size = 0x2000, scoped, tag = 'input window, operand 1, single buffered']
    #allocation8 [shape = 's32[1]{0}', space=sflag, size = 0x4, scoped, tag = 'scoped memory for tpu_custom_call.1']
    #allocation9 [shape = 'u8[16384]{0}', space=vmem, size = 0x4000, scoped, tag = 'input window, operand 2, single buffered']
    #allocation10 [shape = 'u8[16384]{0}', space=vmem, size = 0x4000, scoped, tag = 'input window, operand 4, single buffered']
    #allocation11 [shape = 's32[1]{0}', space=sflag, size = 0x4, scoped, tag = 'scoped memory for tpu_custom_call.1']
    #allocation12 [shape = 'u8[16384]{0}', space=vmem, size = 0x4000, scoped, tag = 'input window, operand 5, single buffered']
    %16 = vsyncpa [#allocation6], 0
    %17 = vsyncpa [#allocation8], 0
    %18 = vsyncpa [#allocation11], 0
    // Predicated region
    $region2: #{tpu_custom_call.1} parent=1 // pred_check
      _
    $region3: #{tpu_custom_call.1} parent=1 // pred_check_branch
      %20 = sbr.rel (0) target = $region5
    $region4: #{tpu_custom_call.1} parent=1 // pred_region
      %s22 = ssub.s32 1024, 1024
      %23 = vsyncadd [#allocation6], %s22
      %s24 = sshll.u32 [#allocation5], 4
      %s25 = int_to_ptr.vmem [resolvable:$true] %s24
      %30 = dma.hbm_to_vmem [thread:$0]  %s0, 1024, %s25, [#allocation6], 128, 128, 8
    $region5: #{tpu_custom_call.1} parent=1 // pred_fallthru
      _
    // Predicated region
    $region6: #{tpu_custom_call.1} parent=1 // pred_check
      _
    $region7: #{tpu_custom_call.1} parent=1 // pred_check_branch
      %32 = sbr.rel (0) target = $region9
    $region8: #{tpu_custom_call.1} parent=1 // pred_region
      %s34 = ssub.s32 256, 256
      %35 = vsyncadd [#allocation8], %s34
      %s36 = sshll.u32 [#allocation7], 4
      %s37 = int_to_ptr.vmem [resolvable:$true] %s36
      %42 = dma.hbm_to_vmem [thread:$0]  %s1, 256, %s37, [#allocation8], 128, 128, 8
    $region9: #{tpu_custom_call.1} parent=1 // pred_fallthru
      _
    // Predicated region
    $region10: #{tpu_custom_call.1} parent=1 // pred_check
      _
    $region11: #{tpu_custom_call.1} parent=1 // pred_check_branch
      %44 = sbr.rel (0) target = $region13
    $region12: #{tpu_custom_call.1} parent=1 // pred_region
      %s46 = ssub.s32 512, 512
      %47 = vsyncadd [#allocation8], %s46
      %s48 = sshll.u32 [#allocation9], 4
      %s49 = int_to_ptr.vmem [resolvable:$true] %s48
      %54 = dma.hbm_to_vmem [thread:$0]  %s2, 512, %s49, [#allocation8], 128, 128, 8
    $region13: #{tpu_custom_call.1} parent=1 // pred_fallthru
      _
    // Predicated region
    $region14: #{tpu_custom_call.1} parent=1 // pred_check
      _
    $region15: #{tpu_custom_call.1} parent=1 // pred_check_branch
      %56 = sbr.rel (0) target = $region17
    $region16: #{tpu_custom_call.1} parent=1 // pred_region
      _
    $region17: #{tpu_custom_call.1} parent=1 // pred_fallthru
      _
    // Predicated region
    $region18: #{tpu_custom_call.1} parent=1 // pred_check
      _
    $region19: #{tpu_custom_call.1} parent=1 // pred_check_branch
      %58 = sbr.rel (0) target = $region21
    $region20: #{tpu_custom_call.1} parent=1 // pred_region
      %s60 = ssub.s32 512, 512
      %61 = vsyncadd [#allocation11], %s60
      %s62 = sshll.u32 [#allocation10], 4
      %s63 = int_to_ptr.vmem [resolvable:$true] %s62
      %68 = dma.hbm_to_vmem [thread:$0]  %s4, 512, %s63, [#allocation11], 128, 128, 8
    $region21: #{tpu_custom_call.1} parent=1 // pred_fallthru
      _
    // Predicated region
    $region22: #{tpu_custom_call.1} parent=1 // pred_check
      _
    $region23: #{tpu_custom_call.1} parent=1 // pred_check_branch
      %70 = sbr.rel (0) target = $region25
    $region24: #{tpu_custom_call.1} parent=1 // pred_region
      %s72 = ssub.s32 512, 512
      %73 = vsyncadd [#allocation11], %s72
      %s74 = sshll.u32 [#allocation12], 4
      %s75 = int_to_ptr.vmem [resolvable:$true] %s74
      %80 = dma.hbm_to_vmem [thread:$0]  %s5, 512, %s75, [#allocation11], 128, 128, 8
    $region25: #{tpu_custom_call.1} parent=1 // pred_fallthru
      _
    // Predicated region
    $region26: #{tpu_custom_call.1} parent=1 // pred_check
      _
    $region27: #{tpu_custom_call.1} parent=1 // pred_check_branch
      %82 = sbr.rel (0) target = $region29
    $region28: #{tpu_custom_call.1} parent=1 // pred_region
      _
    $region29: #{tpu_custom_call.1} parent=1 // pred_fallthru
      _
    // Predicated region
    $region30: #{tpu_custom_call.1} parent=1 // pred_check
      _
    $region31: #{tpu_custom_call.1} parent=1 // pred_check_branch
      %84 = sbr.rel (0) target = $region33
    $region32: #{tpu_custom_call.1} parent=1 // pred_region
      _
    $region33: #{tpu_custom_call.1} parent=1 // pred_fallthru
      _
    // Predicated region
    $region34: #{tpu_custom_call.1} parent=1 // pred_check
      _
    $region35: #{tpu_custom_call.1} parent=1 // pred_check_branch
      %86 = sbr.rel (0) target = $region37
    $region36: #{tpu_custom_call.1} parent=1 // pred_region
      _
    $region37: #{tpu_custom_call.1} parent=1 // pred_fallthru
      _
    // Predicated region
    $region38: #{tpu_custom_call.1} parent=1 // pred_check
      _
    $region39: #{tpu_custom_call.1} parent=1 // pred_check_branch
      %88 = sbr.rel (0) target = $region41
    $region40: #{tpu_custom_call.1} parent=1 // pred_region
      %89 = dma.done [#allocation6], 1024
    $region41: #{tpu_custom_call.1} parent=1 // pred_fallthru
      _
    // Predicated region
    $region42: #{tpu_custom_call.1} parent=1 // pred_check
      _
    $region43: #{tpu_custom_call.1} parent=1 // pred_check_branch
      %91 = sbr.rel (0) target = $region45
    $region44: #{tpu_custom_call.1} parent=1 // pred_region
      %92 = dma.done [#allocation8], 256
    $region45: #{tpu_custom_call.1} parent=1 // pred_fallthru
      _
    // Predicated region
    $region46: #{tpu_custom_call.1} parent=1 // pred_check
      _
    $region47: #{tpu_custom_call.1} parent=1 // pred_check_branch
      %94 = sbr.rel (0) target = $region49
    $region48: #{tpu_custom_call.1} parent=1 // pred_region
      %95 = dma.done [#allocation8], 512
    $region49: #{tpu_custom_call.1} parent=1 // pred_fallthru
      _
    // Predicated region
    $region50: #{tpu_custom_call.1} parent=1 // pred_check
      _
    $region51: #{tpu_custom_call.1} parent=1 // pred_check_branch
      %97 = sbr.rel (0) target = $region53
    $region52: #{tpu_custom_call.1} parent=1 // pred_region
      %98 = dma.done [#allocation11], 512
    $region53: #{tpu_custom_call.1} parent=1 // pred_fallthru
      _
    // Predicated region
    $region54: #{tpu_custom_call.1} parent=1 // pred_check
      _
    $region55: #{tpu_custom_call.1} parent=1 // pred_check_branch
      %100 = sbr.rel (0) target = $region57
    $region56: #{tpu_custom_call.1} parent=1 // pred_region
      %101 = dma.done [#allocation11], 512
    $region57: #{tpu_custom_call.1} parent=1 // pred_fallthru
      _
    %v102 = vlaneseq
    %v103 = vand.u32 %v102, 127
    %vm104 = vcmp.ge.s32.totalorder %v103, 64
    %vm105 = vcmp.lt.s32.totalorder %v103, 96
    %vm106 = vmand %vm104, %vm105
    %v107 = vld [vmem:[#allocation7] sm:$0xff]
    %v108 = vld [vmem:[#allocation7 + $0x8] sm:$0xff]
    %v109 = vld [vmem:[#allocation9] sm:$0xff]
    %v110 = vld [vmem:[#allocation9 + $0x8] sm:$0xff]
    %v111 = vld [vmem:[#allocation9 + $0x10] sm:$0xff]
    %v112 = vld [vmem:[#allocation9 + $0x18] sm:$0xff]
    %v113 = vld [vmem:[%s3] sm:$0x1]
    %v114 = vld [vmem:[#allocation5] sm:$0xff]
    %v115 = vld [vmem:[#allocation5 + $0x8] sm:$0xff]
    %v116 = vld [vmem:[#allocation5 + $0x10] sm:$0xff]
    %v117 = vld [vmem:[#allocation5 + $0x18] sm:$0xff]
    %v118 = vld [vmem:[#allocation5 + $0x20] sm:$0xff]
    %v119 = vld [vmem:[#allocation5 + $0x28] sm:$0xff]
    %v120 = vld [vmem:[#allocation5 + $0x30] sm:$0xff]
    %v121 = vld [vmem:[#allocation5 + $0x38] sm:$0xff]
    %v123 = vlaneseq
    %v124 = vshrl.u32 %v123, 7
    %v125 = vsub.s32 0, %v124
    %v126 = vrot.slane %v113, %v125
    %vm128 = vcmask 130048
    %v130 = vsel %vm128, %v114, 0
    %v133 = vsel %vm128, %v115, 0
    %v136 = vsel %vm128, %v116, 0
    %v139 = vsel %vm128, %v117, 0
    %v142 = vsel %vm128, %v118, 0
    %v145 = vsel %vm128, %v119, 0
    %v148 = vsel %vm128, %v120, 0
    %v151 = vsel %vm128, %v121, 0
    %153 = vmatprep.subr.mxu0 0.0
    %154 = vmatpush1.msra.mxu0 0.0
    %155 = vmatprep.subr.mxu0 0.0
    %156 = vmatpush1.msra.mxu0 0.0
    %157 = vmatprep.subr.mxu0 0.0
    %158 = vmatpush1.msra.mxu0 0.0
    %159 = vmatprep.subr.mxu0 0.0
    %160 = vmatpush1.msra.mxu0 0.0
    %161 = vmatprep.subr.mxu0 0.0
    %162 = vmatpush1.msra.mxu0 0.0
    %163 = vmatprep.subr.mxu0 0.0
    %164 = vmatpush1.msra.mxu0 0.0
    %165 = vmatprep.subr.mxu0 0.0
    %166 = vmatpush1.msra.mxu0 0.0
    %167 = vmatprep.subr.mxu0 0.0
    %168 = vmatpush1.msra.mxu0 0.0
    %169 = vmatprep.subr.mxu0 0.0
    %170 = vmatpush1.msra.mxu0 0.0
    %171 = vmatprep.subr.mxu0 0.0
    %172 = vmatpush1.msra.mxu0 0.0
    %173 = vmatprep.subr.mxu0 0.0
    %174 = vmatpush1.msra.mxu0 0.0
    %175 = vmatprep.subr.mxu0 0.0
    %176 = vmatpush1.msra.mxu0 0.0
    %177 = vmatprep.subr.mxu0 0.0
    %178 = vmatpush1.msra.mxu0 0.0
    %179 = vmatprep.subr.mxu0 0.0
    %180 = vmatpush1.msra.mxu0 0.0
    %181 = vmatprep.subr.mxu0 0.0
    %182 = vmatpush1.msra.mxu0 %v108
    %183 = vmatprep.subr.mxu0 0.0
    %184 = vmatpush1.msra.mxu0 %v107
    %185 = vmatprep.subr.mxu0 0.0
    %186 = vmatpush2.msra.mxu0 0.0
    %187 = vmatprep.subr.mxu0 0.0
    %188 = vmatpush2.msra.mxu0 0.0
    %189 = vmatprep.subr.mxu0 0.0
    %190 = vmatpush2.msra.mxu0 0.0
    %191 = vmatprep.subr.mxu0 0.0
    %192 = vmatpush2.msra.mxu0 0.0
    %193 = vmatprep.subr.mxu0 0.0
    %194 = vmatpush2.msra.mxu0 0.0
    %195 = vmatprep.subr.mxu0 0.0
    %196 = vmatpush2.msra.mxu0 0.0
    %197 = vmatprep.subr.mxu0 0.0
    %198 = vmatpush2.msra.mxu0 0.0
    %199 = vmatprep.subr.mxu0 0.0
    %200 = vmatpush2.msra.mxu0 0.0
    %201 = vmatprep.subr.mxu0 0.0
    %202 = vmatpush2.msra.mxu0 0.0
    %203 = vmatprep.subr.mxu0 0.0
    %204 = vmatpush2.msra.mxu0 0.0
    %205 = vmatprep.subr.mxu0 0.0
    %206 = vmatpush2.msra.mxu0 0.0
    %207 = vmatprep.subr.mxu0 0.0
    %208 = vmatpush2.msra.mxu0 0.0
    %209 = vmatprep.subr.mxu0 0.0
    %210 = vmatpush2.msra.mxu0 0.0
    %211 = vmatprep.subr.mxu0 0.0
    %212 = vmatpush2.msra.mxu0 0.0
    %213 = vmatprep.subr.mxu0 0.0
    %214 = vmatpush2.msra.mxu0 0.0
    %215 = vmatprep.subr.mxu0 0.0
    %216 = vmatpush2.msra.mxu0 0.0
    %217 = vmatprep.mubr.f32.mxu0 0.0
    %218 = vmatmul.mubr.f32.gmra.mxu0 %v130
    %v219 = vpop.f32.mrf.mxu0
    %v220 = vadd.f32 %v126, %v219
    %v221 = vpop.f32.mrf.mxu0
    %222 = vmatprep.mubr.f32.mxu0 0.0
    %223 = vmatmul.mubr.f32.gmra.mxu0 %v133
    %v224 = vpop.f32.mrf.mxu0
    %v225 = vadd.f32 %v126, %v224
    %v226 = vpop.f32.mrf.mxu0
    %227 = vmatprep.mubr.f32.mxu0 0.0
    %228 = vmatmul.mubr.f32.gmra.mxu0 %v136
    %v229 = vpop.f32.mrf.mxu0
    %v230 = vadd.f32 %v126, %v229
    %v231 = vpop.f32.mrf.mxu0
    %232 = vmatprep.mubr.f32.mxu0 0.0
    %233 = vmatmul.mubr.f32.gmra.mxu0 %v139
    %v234 = vpop.f32.mrf.mxu0
    %v235 = vadd.f32 %v126, %v234
    %v236 = vpop.f32.mrf.mxu0
    %237 = vmatprep.mubr.f32.mxu0 0.0
    %238 = vmatmul.mubr.f32.gmra.mxu0 %v142
    %v239 = vpop.f32.mrf.mxu0
    %v240 = vadd.f32 %v126, %v239
    %v241 = vpop.f32.mrf.mxu0
    %242 = vmatprep.mubr.f32.mxu0 0.0
    %243 = vmatmul.mubr.f32.gmra.mxu0 %v145
    %v244 = vpop.f32.mrf.mxu0
    %v245 = vadd.f32 %v126, %v244
    %v246 = vpop.f32.mrf.mxu0
    %247 = vmatprep.mubr.f32.mxu0 0.0
    %248 = vmatmul.mubr.f32.gmra.mxu0 %v148
    %v249 = vpop.f32.mrf.mxu0
    %v250 = vadd.f32 %v126, %v249
    %v251 = vpop.f32.mrf.mxu0
    %252 = vmatprep.mubr.f32.mxu0 0.0
    %253 = vmatmul.mubr.f32.gmra.mxu0 %v151
    %v254 = vpop.f32.mrf.mxu0
    %v255 = vadd.f32 %v126, %v254
    %v256 = vpop.f32.mrf.mxu0
    %257 = vdwg.mxu0
    %258 = vst [vmem:[#allocation3] sm:$0xff] %v220
    %259 = vst [vmem:[#allocation3 + $0x8] sm:$0xff] %v225
    %260 = vst [vmem:[#allocation3 + $0x10] sm:$0xff] %v230
    %261 = vst [vmem:[#allocation3 + $0x18] sm:$0xff] %v235
    %262 = vst [vmem:[#allocation3 + $0x20] sm:$0xff] %v240
    %263 = vst [vmem:[#allocation3 + $0x28] sm:$0xff] %v245
    %264 = vst [vmem:[#allocation3 + $0x30] sm:$0xff] %v250
    %265 = vst [vmem:[#allocation3 + $0x38] sm:$0xff] %v255
    %v266 = vld [vmem:[#allocation3] sm:$0xff]
    %vm267 = vcmask 261120
    %v269 = vsel %vm267, 0.0, 0
    %271 = vmatprep.subr.mxu0 0.0
    %272 = vmatpush1.msra.mxu0 0.0
    %273 = vmatprep.subr.mxu0 0.0
    %274 = vmatpush1.msra.mxu0 0.0
    %275 = vmatprep.subr.mxu0 0.0
    %276 = vmatpush1.msra.mxu0 0.0
    %277 = vmatprep.subr.mxu0 0.0
    %278 = vmatpush1.msra.mxu0 0.0
    %279 = vmatprep.subr.mxu0 0.0
    %280 = vmatpush1.msra.mxu0 0.0
    %281 = vmatprep.subr.mxu0 0.0
    %282 = vmatpush1.msra.mxu0 0.0
    %283 = vmatprep.subr.mxu0 0.0
    %284 = vmatpush1.msra.mxu0 0.0
    %285 = vmatprep.subr.mxu0 0.0
    %286 = vmatpush1.msra.mxu0 0.0
    %287 = vmatprep.subr.mxu0 0.0
    %288 = vmatpush1.msra.mxu0 0.0
    %289 = vmatprep.subr.mxu0 0.0
    %290 = vmatpush1.msra.mxu0 0.0
    %291 = vmatprep.subr.mxu0 0.0
    %292 = vmatpush1.msra.mxu0 0.0
    %293 = vmatprep.subr.mxu0 0.0
    %294 = vmatpush1.msra.mxu0 0.0
    %295 = vmatprep.subr.mxu0 0.0
    %296 = vmatpush1.msra.mxu0 %v112
    %297 = vmatprep.subr.mxu0 0.0
    %298 = vmatpush1.msra.mxu0 %v111
    %299 = vmatprep.subr.mxu0 0.0
    %300 = vmatpush1.msra.mxu0 %v110
    %301 = vmatprep.subr.mxu0 0.0
    %302 = vmatpush1.msra.mxu0 %v109
    %303 = vmatprep.subr.mxu0 0.0
    %304 = vmatpush2.msra.mxu0 0.0
    %305 = vmatprep.subr.mxu0 0.0
    %306 = vmatpush2.msra.mxu0 0.0
    %307 = vmatprep.subr.mxu0 0.0
    %308 = vmatpush2.msra.mxu0 0.0
    %309 = vmatprep.subr.mxu0 0.0
    %310 = vmatpush2.msra.mxu0 0.0
    %311 = vmatprep.subr.mxu0 0.0
    %312 = vmatpush2.msra.mxu0 0.0
    %313 = vmatprep.subr.mxu0 0.0
    %314 = vmatpush2.msra.mxu0 0.0
    %315 = vmatprep.subr.mxu0 0.0
    %316 = vmatpush2.msra.mxu0 0.0
    %317 = vmatprep.subr.mxu0 0.0
    %318 = vmatpush2.msra.mxu0 0.0
    %319 = vmatprep.subr.mxu0 0.0
    %320 = vmatpush2.msra.mxu0 0.0
    %321 = vmatprep.subr.mxu0 0.0
    %322 = vmatpush2.msra.mxu0 0.0
    %323 = vmatprep.subr.mxu0 0.0
    %324 = vmatpush2.msra.mxu0 0.0
    %325 = vmatprep.subr.mxu0 0.0
    %326 = vmatpush2.msra.mxu0 0.0
    %327 = vmatprep.subr.mxu0 0.0
    %328 = vmatpush2.msra.mxu0 0.0
    %329 = vmatprep.subr.mxu0 0.0
    %330 = vmatpush2.msra.mxu0 0.0
    %331 = vmatprep.subr.mxu0 0.0
    %332 = vmatpush2.msra.mxu0 0.0
    %333 = vmatprep.subr.mxu0 0.0
    %334 = vmatpush2.msra.mxu0 0.0
    %335 = vmatprep.mubr.f32.mxu0 0.0
    %336 = vmatmul.mubr.f32.gmra.mxu0 %v269
    %v337 = vpop.f32.mrf.mxu0
    %v338 = vadd.f32 0.0, %v337
    %v339 = vpop.f32.mrf.mxu0
    %340 = vdwg.mxu0
    %v341 = vadd.f32 %v266, %v338
    %v342 = vtanh.pop %v341
    %v343 = vxor.u32 %v341, 2147483648
    %v344 = vmul.f32 %v343, 1.442695
    %v345 = vpow.pop %v344
    %v346 = vadd.f32 %v345, 1.0
    %v347 = vrcp.pop %v346
    %v348 = vmul.f32 1.0, %v347
    %v349 = vsel %vm106, %v342, %v348
    %v350 = vmul.f32 %v349, 0.0
    %352 = vrot.lane.b32.xlu0 %v349, 64
    %v353 = vpop.permute.xlu0 %352
    %v355 = vmul.f32 %v349, %v353
    %357 = vrot.lane.b32.xlu0 %v355, 32
    %v358 = vpop.permute.xlu0 %357
    %v360 = vadd.f32 %v350, %v358
    %v361 = vtanh.pop %v360
    %363 = vrot.lane.b32.xlu0 %v361, 64
    %v364 = vpop.permute.xlu0 %363
    %v366 = vmul.f32 %v349, %v364
    %368 = vrot.lane.b32.xlu0 %v366, 32
    %v369 = vpop.permute.xlu0 %368
    %371 = vst.msk [vmem:[#allocation2] sm:$0xff] %vm267, %v369
    %s372 = scalar_lea.vmem [#allocation3], 8
    %v373 = vld [vmem:[%s372] sm:$0xff]
    %v374 = vsel %vm267, %v369, 0
    %376 = vmatprep.subr.mxu0 0.0
    %377 = vmatpush1.msra.mxu0 0.0
    %378 = vmatprep.subr.mxu0 0.0
    %379 = vmatpush1.msra.mxu0 0.0
    %380 = vmatprep.subr.mxu0 0.0
    %381 = vmatpush1.msra.mxu0 0.0
    %382 = vmatprep.subr.mxu0 0.0
    %383 = vmatpush1.msra.mxu0 0.0
    %384 = vmatprep.subr.mxu0 0.0
    %385 = vmatpush1.msra.mxu0 0.0
    %386 = vmatprep.subr.mxu0 0.0
    %387 = vmatpush1.msra.mxu0 0.0
    %388 = vmatprep.subr.mxu0 0.0
    %389 = vmatpush1.msra.mxu0 0.0
    %390 = vmatprep.subr.mxu0 0.0
    %391 = vmatpush1.msra.mxu0 0.0
    %392 = vmatprep.subr.mxu0 0.0
    %393 = vmatpush1.msra.mxu0 0.0
    %394 = vmatprep.subr.mxu0 0.0
    %395 = vmatpush1.msra.mxu0 0.0
    %396 = vmatprep.subr.mxu0 0.0
    %397 = vmatpush1.msra.mxu0 0.0
    %398 = vmatprep.subr.mxu0 0.0
    %399 = vmatpush1.msra.mxu0 0.0
    %400 = vmatprep.subr.mxu0 0.0
    %401 = vmatpush1.msra.mxu0 %v112
    %402 = vmatprep.subr.mxu0 0.0
    %403 = vmatpush1.msra.mxu0 %v111
    %404 = vmatprep.subr.mxu0 0.0
    %405 = vmatpush1.msra.mxu0 %v110
    %406 = vmatprep.subr.mxu0 0.0
    %407 = vmatpush1.msra.mxu0 %v109
    %408 = vmatprep.subr.mxu0 0.0
    %409 = vmatpush2.msra.mxu0 0.0
    %410 = vmatprep.subr.mxu0 0.0
    %411 = vmatpush2.msra.mxu0 0.0
    %412 = vmatprep.subr.mxu0 0.0
    %413 = vmatpush2.msra.mxu0 0.0
    %414 = vmatprep.subr.mxu0 0.0
    %415 = vmatpush2.msra.mxu0 0.0
    %416 = vmatprep.subr.mxu0 0.0
    %417 = vmatpush2.msra.mxu0 0.0
    %418 = vmatprep.subr.mxu0 0.0
    %419 = vmatpush2.msra.mxu0 0.0
    %420 = vmatprep.subr.mxu0 0.0
    %421 = vmatpush2.msra.mxu0 0.0
    %422 = vmatprep.subr.mxu0 0.0
    %423 = vmatpush2.msra.mxu0 0.0
    %424 = vmatprep.subr.mxu0 0.0
    %425 = vmatpush2.msra.mxu0 0.0
    %426 = vmatprep.subr.mxu0 0.0
    %427 = vmatpush2.msra.mxu0 0.0
    %428 = vmatprep.subr.mxu0 0.0
    %429 = vmatpush2.msra.mxu0 0.0
    %430 = vmatprep.subr.mxu0 0.0
    %431 = vmatpush2.msra.mxu0 0.0
    %432 = vmatprep.subr.mxu0 0.0
    %433 = vmatpush2.msra.mxu0 0.0
    %434 = vmatprep.subr.mxu0 0.0
    %435 = vmatpush2.msra.mxu0 0.0
    %436 = vmatprep.subr.mxu0 0.0
    %437 = vmatpush2.msra.mxu0 0.0
    %438 = vmatprep.subr.mxu0 0.0
    %439 = vmatpush2.msra.mxu0 0.0
    %440 = vmatprep.mubr.f32.mxu0 0.0
    %441 = vmatmul.mubr.f32.gmra.mxu0 %v374
    %v442 = vpop.f32.mrf.mxu0
    %v443 = vadd.f32 0.0, %v442
    %v444 = vpop.f32.mrf.mxu0
    %445 = vdwg.mxu0
    %v446 = vadd.f32 %v373, %v443
    %v447 = vtanh.pop %v446
    %v448 = vxor.u32 %v446, 2147483648
    %v449 = vmul.f32 %v448, 1.442695
    %v450 = vpow.pop %v449
    %v451 = vadd.f32 %v450, 1.0
    %v452 = vrcp.pop %v451
    %v453 = vmul.f32 1.0, %v452
    %v454 = vsel %vm106, %v447, %v453
    %v455 = vmul.f32 %v454, %v360
    %457 = vrot.lane.b32.xlu0 %v454, 64
    %v458 = vpop.permute.xlu0 %457
    %v460 = vmul.f32 %v454, %v458
    %462 = vrot.lane.b32.xlu0 %v460, 32
    %v463 = vpop.permute.xlu0 %462
    %v465 = vadd.f32 %v455, %v463
    %v466 = vtanh.pop %v465
    %468 = vrot.lane.b32.xlu0 %v466, 64
    %v469 = vpop.permute.xlu0 %468
    %v471 = vmul.f32 %v454, %v469
    %473 = vrot.lane.b32.xlu0 %v471, 32
    %v474 = vpop.permute.xlu0 %473
    %s476 = scalar_lea.vmem [#allocation2], 8
    %477 = vst.msk [vmem:[%s476] sm:$0xff] %vm267, %v474
    %s478 = scalar_lea.vmem [#allocation3], 16
    %v479 = vld [vmem:[%s478] sm:$0xff]
    %v480 = vsel %vm267, %v474, 0
    %482 = vmatprep.subr.mxu0 0.0
    %483 = vmatpush1.msra.mxu0 0.0
    %484 = vmatprep.subr.mxu0 0.0
    %485 = vmatpush1.msra.mxu0 0.0
    %486 = vmatprep.subr.mxu0 0.0
    %487 = vmatpush1.msra.mxu0 0.0
    %488 = vmatprep.subr.mxu0 0.0
    %489 = vmatpush1.msra.mxu0 0.0
    %490 = vmatprep.subr.mxu0 0.0
    %491 = vmatpush1.msra.mxu0 0.0
    %492 = vmatprep.subr.mxu0 0.0
    %493 = vmatpush1.msra.mxu0 0.0
    %494 = vmatprep.subr.mxu0 0.0
    %495 = vmatpush1.msra.mxu0 0.0
    %496 = vmatprep.subr.mxu0 0.0
    %497 = vmatpush1.msra.mxu0 0.0
    %498 = vmatprep.subr.mxu0 0.0
    %499 = vmatpush1.msra.mxu0 0.0
    %500 = vmatprep.subr.mxu0 0.0
    %501 = vmatpush1.msra.mxu0 0.0
    %502 = vmatprep.subr.mxu0 0.0
    %503 = vmatpush1.msra.mxu0 0.0
    %504 = vmatprep.subr.mxu0 0.0
    %505 = vmatpush1.msra.mxu0 0.0
    %506 = vmatprep.subr.mxu0 0.0
    %507 = vmatpush1.msra.mxu0 %v112
    %508 = vmatprep.subr.mxu0 0.0
    %509 = vmatpush1.msra.mxu0 %v111
    %510 = vmatprep.subr.mxu0 0.0
    %511 = vmatpush1.msra.mxu0 %v110
    %512 = vmatprep.subr.mxu0 0.0
    %513 = vmatpush1.msra.mxu0 %v109
    %514 = vmatprep.subr.mxu0 0.0
    %515 = vmatpush2.msra.mxu0 0.0
    %516 = vmatprep.subr.mxu0 0.0
    %517 = vmatpush2.msra.mxu0 0.0
    %518 = vmatprep.subr.mxu0 0.0
    %519 = vmatpush2.msra.mxu0 0.0
    %520 = vmatprep.subr.mxu0 0.0
    %521 = vmatpush2.msra.mxu0 0.0
    %522 = vmatprep.subr.mxu0 0.0
    %523 = vmatpush2.msra.mxu0 0.0
    %524 = vmatprep.subr.mxu0 0.0
    %525 = vmatpush2.msra.mxu0 0.0
    %526 = vmatprep.subr.mxu0 0.0
    %527 = vmatpush2.msra.mxu0 0.0
    %528 = vmatprep.subr.mxu0 0.0
    %529 = vmatpush2.msra.mxu0 0.0
    %530 = vmatprep.subr.mxu0 0.0
    %531 = vmatpush2.msra.mxu0 0.0
    %532 = vmatprep.subr.mxu0 0.0
    %533 = vmatpush2.msra.mxu0 0.0
    %534 = vmatprep.subr.mxu0 0.0
    %535 = vmatpush2.msra.mxu0 0.0
    %536 = vmatprep.subr.mxu0 0.0
    %537 = vmatpush2.msra.mxu0 0.0
    %538 = vmatprep.subr.mxu0 0.0
    %539 = vmatpush2.msra.mxu0 0.0
    %540 = vmatprep.subr.mxu0 0.0
    %541 = vmatpush2.msra.mxu0 0.0
    %542 = vmatprep.subr.mxu0 0.0
    %543 = vmatpush2.msra.mxu0 0.0
    %544 = vmatprep.subr.mxu0 0.0
    %545 = vmatpush2.msra.mxu0 0.0
    %546 = vmatprep.mubr.f32.mxu0 0.0
    %547 = vmatmul.mubr.f32.gmra.mxu0 %v480
    %v548 = vpop.f32.mrf.mxu0
    %v549 = vadd.f32 0.0, %v548
    %v550 = vpop.f32.mrf.mxu0
    %551 = vdwg.mxu0
    %v552 = vadd.f32 %v479, %v549
    %v553 = vtanh.pop %v552
    %v554 = vxor.u32 %v552, 2147483648
    %v555 = vmul.f32 %v554, 1.442695
    %v556 = vpow.pop %v555
    %v557 = vadd.f32 %v556, 1.0
    %v558 = vrcp.pop %v557
    %v559 = vmul.f32 1.0, %v558
    %v560 = vsel %vm106, %v553, %v559
    %v561 = vmul.f32 %v560, %v465
    %563 = vrot.lane.b32.xlu0 %v560, 64
    %v564 = vpop.permute.xlu0 %563
    %v566 = vmul.f32 %v560, %v564
    %568 = vrot.lane.b32.xlu0 %v566, 32
    %v569 = vpop.permute.xlu0 %568
    %v571 = vadd.f32 %v561, %v569
    %v572 = vtanh.pop %v571
    %574 = vrot.lane.b32.xlu0 %v572, 64
    %v575 = vpop.permute.xlu0 %574
    %v577 = vmul.f32 %v560, %v575
    %579 = vrot.lane.b32.xlu0 %v577, 32
    %v580 = vpop.permute.xlu0 %579
    %s582 = scalar_lea.vmem [#allocation2], 16
    %583 = vst.msk [vmem:[%s582] sm:$0xff] %vm267, %v580
    %s584 = scalar_lea.vmem [#allocation3], 24
    %v585 = vld [vmem:[%s584] sm:$0xff]
    %v586 = vsel %vm267, %v580, 0
    %588 = vmatprep.subr.mxu0 0.0
    %589 = vmatpush1.msra.mxu0 0.0
    %590 = vmatprep.subr.mxu0 0.0
    %591 = vmatpush1.msra.mxu0 0.0
    %592 = vmatprep.subr.mxu0 0.0
    %593 = vmatpush1.msra.mxu0 0.0
    %594 = vmatprep.subr.mxu0 0.0
    %595 = vmatpush1.msra.mxu0 0.0
    %596 = vmatprep.subr.mxu0 0.0
    %597 = vmatpush1.msra.mxu0 0.0
    %598 = vmatprep.subr.mxu0 0.0
    %599 = vmatpush1.msra.mxu0 0.0
    %600 = vmatprep.subr.mxu0 0.0
    %601 = vmatpush1.msra.mxu0 0.0
    %602 = vmatprep.subr.mxu0 0.0
    %603 = vmatpush1.msra.mxu0 0.0
    %604 = vmatprep.subr.mxu0 0.0
    %605 = vmatpush1.msra.mxu0 0.0
    %606 = vmatprep.subr.mxu0 0.0
    %607 = vmatpush1.msra.mxu0 0.0
    %608 = vmatprep.subr.mxu0 0.0
    %609 = vmatpush1.msra.mxu0 0.0
    %610 = vmatprep.subr.mxu0 0.0
    %611 = vmatpush1.msra.mxu0 0.0
    %612 = vmatprep.subr.mxu0 0.0
    %613 = vmatpush1.msra.mxu0 %v112
    %614 = vmatprep.subr.mxu0 0.0
    %615 = vmatpush1.msra.mxu0 %v111
    %616 = vmatprep.subr.mxu0 0.0
    %617 = vmatpush1.msra.mxu0 %v110
    %618 = vmatprep.subr.mxu0 0.0
    %619 = vmatpush1.msra.mxu0 %v109
    %620 = vmatprep.subr.mxu0 0.0
    %621 = vmatpush2.msra.mxu0 0.0
    %622 = vmatprep.subr.mxu0 0.0
    %623 = vmatpush2.msra.mxu0 0.0
    %624 = vmatprep.subr.mxu0 0.0
    %625 = vmatpush2.msra.mxu0 0.0
    %626 = vmatprep.subr.mxu0 0.0
    %627 = vmatpush2.msra.mxu0 0.0
    %628 = vmatprep.subr.mxu0 0.0
    %629 = vmatpush2.msra.mxu0 0.0
    %630 = vmatprep.subr.mxu0 0.0
    %631 = vmatpush2.msra.mxu0 0.0
    %632 = vmatprep.subr.mxu0 0.0
    %633 = vmatpush2.msra.mxu0 0.0
    %634 = vmatprep.subr.mxu0 0.0
    %635 = vmatpush2.msra.mxu0 0.0
    %636 = vmatprep.subr.mxu0 0.0
    %637 = vmatpush2.msra.mxu0 0.0
    %638 = vmatprep.subr.mxu0 0.0
    %639 = vmatpush2.msra.mxu0 0.0
    %640 = vmatprep.subr.mxu0 0.0
    %641 = vmatpush2.msra.mxu0 0.0
    %642 = vmatprep.subr.mxu0 0.0
    %643 = vmatpush2.msra.mxu0 0.0
    %644 = vmatprep.subr.mxu0 0.0
    %645 = vmatpush2.msra.mxu0 0.0
    %646 = vmatprep.subr.mxu0 0.0
    %647 = vmatpush2.msra.mxu0 0.0
    %648 = vmatprep.subr.mxu0 0.0
    %649 = vmatpush2.msra.mxu0 0.0
    %650 = vmatprep.subr.mxu0 0.0
    %651 = vmatpush2.msra.mxu0 0.0
    %652 = vmatprep.mubr.f32.mxu0 0.0
    %653 = vmatmul.mubr.f32.gmra.mxu0 %v586
    %v654 = vpop.f32.mrf.mxu0
    %v655 = vadd.f32 0.0, %v654
    %v656 = vpop.f32.mrf.mxu0
    %657 = vdwg.mxu0
    %v658 = vadd.f32 %v585, %v655
    %v659 = vtanh.pop %v658
    %v660 = vxor.u32 %v658, 2147483648
    %v661 = vmul.f32 %v660, 1.442695
    %v662 = vpow.pop %v661
    %v663 = vadd.f32 %v662, 1.0
    %v664 = vrcp.pop %v663
    %v665 = vmul.f32 1.0, %v664
    %v666 = vsel %vm106, %v659, %v665
    %v667 = vmul.f32 %v666, %v571
    %669 = vrot.lane.b32.xlu0 %v666, 64
    %v670 = vpop.permute.xlu0 %669
    %v672 = vmul.f32 %v666, %v670
    %674 = vrot.lane.b32.xlu0 %v672, 32
    %v675 = vpop.permute.xlu0 %674
    %v677 = vadd.f32 %v667, %v675
    %v678 = vtanh.pop %v677
    %680 = vrot.lane.b32.xlu0 %v678, 64
    %v681 = vpop.permute.xlu0 %680
    %v683 = vmul.f32 %v666, %v681
    %685 = vrot.lane.b32.xlu0 %v683, 32
    %v686 = vpop.permute.xlu0 %685
    %s688 = scalar_lea.vmem [#allocation2], 24
    %689 = vst.msk [vmem:[%s688] sm:$0xff] %vm267, %v686
    %s690 = scalar_lea.vmem [#allocation3], 32
    %v691 = vld [vmem:[%s690] sm:$0xff]
    %v692 = vsel %vm267, %v686, 0
    %694 = vmatprep.subr.mxu0 0.0
    %695 = vmatpush1.msra.mxu0 0.0
    %696 = vmatprep.subr.mxu0 0.0
    %697 = vmatpush1.msra.mxu0 0.0
    %698 = vmatprep.subr.mxu0 0.0
    %699 = vmatpush1.msra.mxu0 0.0
    %700 = vmatprep.subr.mxu0 0.0
    %701 = vmatpush1.msra.mxu0 0.0
    %702 = vmatprep.subr.mxu0 0.0
    %703 = vmatpush1.msra.mxu0 0.0
    %704 = vmatprep.subr.mxu0 0.0
    %705 = vmatpush1.msra.mxu0 0.0
    %706 = vmatprep.subr.mxu0 0.0
    %707 = vmatpush1.msra.mxu0 0.0
    %708 = vmatprep.subr.mxu0 0.0
    %709 = vmatpush1.msra.mxu0 0.0
    %710 = vmatprep.subr.mxu0 0.0
    %711 = vmatpush1.msra.mxu0 0.0
    %712 = vmatprep.subr.mxu0 0.0
    %713 = vmatpush1.msra.mxu0 0.0
    %714 = vmatprep.subr.mxu0 0.0
    %715 = vmatpush1.msra.mxu0 0.0
    %716 = vmatprep.subr.mxu0 0.0
    %717 = vmatpush1.msra.mxu0 0.0
    %718 = vmatprep.subr.mxu0 0.0
    %719 = vmatpush1.msra.mxu0 %v112
    %720 = vmatprep.subr.mxu0 0.0
    %721 = vmatpush1.msra.mxu0 %v111
    %722 = vmatprep.subr.mxu0 0.0
    %723 = vmatpush1.msra.mxu0 %v110
    %724 = vmatprep.subr.mxu0 0.0
    %725 = vmatpush1.msra.mxu0 %v109
    %726 = vmatprep.subr.mxu0 0.0
    %727 = vmatpush2.msra.mxu0 0.0
    %728 = vmatprep.subr.mxu0 0.0
    %729 = vmatpush2.msra.mxu0 0.0
    %730 = vmatprep.subr.mxu0 0.0
    %731 = vmatpush2.msra.mxu0 0.0
    %732 = vmatprep.subr.mxu0 0.0
    %733 = vmatpush2.msra.mxu0 0.0
    %734 = vmatprep.subr.mxu0 0.0
    %735 = vmatpush2.msra.mxu0 0.0
    %736 = vmatprep.subr.mxu0 0.0
    %737 = vmatpush2.msra.mxu0 0.0
    %738 = vmatprep.subr.mxu0 0.0
    %739 = vmatpush2.msra.mxu0 0.0
    %740 = vmatprep.subr.mxu0 0.0
    %741 = vmatpush2.msra.mxu0 0.0
    %742 = vmatprep.subr.mxu0 0.0
    %743 = vmatpush2.msra.mxu0 0.0
    %744 = vmatprep.subr.mxu0 0.0
    %745 = vmatpush2.msra.mxu0 0.0
    %746 = vmatprep.subr.mxu0 0.0
    %747 = vmatpush2.msra.mxu0 0.0
    %748 = vmatprep.subr.mxu0 0.0
    %749 = vmatpush2.msra.mxu0 0.0
    %750 = vmatprep.subr.mxu0 0.0
    %751 = vmatpush2.msra.mxu0 0.0
    %752 = vmatprep.subr.mxu0 0.0
    %753 = vmatpush2.msra.mxu0 0.0
    %754 = vmatprep.subr.mxu0 0.0
    %755 = vmatpush2.msra.mxu0 0.0
    %756 = vmatprep.subr.mxu0 0.0
    %757 = vmatpush2.msra.mxu0 0.0
    %758 = vmatprep.mubr.f32.mxu0 0.0
    %759 = vmatmul.mubr.f32.gmra.mxu0 %v692
    %v760 = vpop.f32.mrf.mxu0
    %v761 = vadd.f32 0.0, %v760
    %v762 = vpop.f32.mrf.mxu0
    %763 = vdwg.mxu0
    %v764 = vadd.f32 %v691, %v761
    %v765 = vtanh.pop %v764
    %v766 = vxor.u32 %v764, 2147483648
    %v767 = vmul.f32 %v766, 1.442695
    %v768 = vpow.pop %v767
    %v769 = vadd.f32 %v768, 1.0
    %v770 = vrcp.pop %v769
    %v771 = vmul.f32 1.0, %v770
    %v772 = vsel %vm106, %v765, %v771
    %v773 = vmul.f32 %v772, %v677
    %775 = vrot.lane.b32.xlu0 %v772, 64
    %v776 = vpop.permute.xlu0 %775
    %v778 = vmul.f32 %v772, %v776
    %780 = vrot.lane.b32.xlu0 %v778, 32
    %v781 = vpop.permute.xlu0 %780
    %v783 = vadd.f32 %v773, %v781
    %v784 = vtanh.pop %v783
    %786 = vrot.lane.b32.xlu0 %v784, 64
    %v787 = vpop.permute.xlu0 %786
    %v789 = vmul.f32 %v772, %v787
    %791 = vrot.lane.b32.xlu0 %v789, 32
    %v792 = vpop.permute.xlu0 %791
    %s794 = scalar_lea.vmem [#allocation2], 32
    %795 = vst.msk [vmem:[%s794] sm:$0xff] %vm267, %v792
    %s796 = scalar_lea.vmem [#allocation3], 40
    %v797 = vld [vmem:[%s796] sm:$0xff]
    %v798 = vsel %vm267, %v792, 0
    %800 = vmatprep.subr.mxu0 0.0
    %801 = vmatpush1.msra.mxu0 0.0
    %802 = vmatprep.subr.mxu0 0.0
    %803 = vmatpush1.msra.mxu0 0.0
    %804 = vmatprep.subr.mxu0 0.0
    %805 = vmatpush1.msra.mxu0 0.0
    %806 = vmatprep.subr.mxu0 0.0
    %807 = vmatpush1.msra.mxu0 0.0
    %808 = vmatprep.subr.mxu0 0.0
    %809 = vmatpush1.msra.mxu0 0.0
    %810 = vmatprep.subr.mxu0 0.0
    %811 = vmatpush1.msra.mxu0 0.0
    %812 = vmatprep.subr.mxu0 0.0
    %813 = vmatpush1.msra.mxu0 0.0
    %814 = vmatprep.subr.mxu0 0.0
    %815 = vmatpush1.msra.mxu0 0.0
    %816 = vmatprep.subr.mxu0 0.0
    %817 = vmatpush1.msra.mxu0 0.0
    %818 = vmatprep.subr.mxu0 0.0
    %819 = vmatpush1.msra.mxu0 0.0
    %820 = vmatprep.subr.mxu0 0.0
    %821 = vmatpush1.msra.mxu0 0.0
    %822 = vmatprep.subr.mxu0 0.0
    %823 = vmatpush1.msra.mxu0 0.0
    %824 = vmatprep.subr.mxu0 0.0
    %825 = vmatpush1.msra.mxu0 %v112
    %826 = vmatprep.subr.mxu0 0.0
    %827 = vmatpush1.msra.mxu0 %v111
    %828 = vmatprep.subr.mxu0 0.0
    %829 = vmatpush1.msra.mxu0 %v110
    %830 = vmatprep.subr.mxu0 0.0
    %831 = vmatpush1.msra.mxu0 %v109
    %832 = vmatprep.subr.mxu0 0.0
    %833 = vmatpush2.msra.mxu0 0.0
    %834 = vmatprep.subr.mxu0 0.0
    %835 = vmatpush2.msra.mxu0 0.0
    %836 = vmatprep.subr.mxu0 0.0
    %837 = vmatpush2.msra.mxu0 0.0
    %838 = vmatprep.subr.mxu0 0.0
    %839 = vmatpush2.msra.mxu0 0.0
    %840 = vmatprep.subr.mxu0 0.0
    %841 = vmatpush2.msra.mxu0 0.0
    %842 = vmatprep.subr.mxu0 0.0
    %843 = vmatpush2.msra.mxu0 0.0
    %844 = vmatprep.subr.mxu0 0.0
    %845 = vmatpush2.msra.mxu0 0.0
    %846 = vmatprep.subr.mxu0 0.0
    %847 = vmatpush2.msra.mxu0 0.0
    %848 = vmatprep.subr.mxu0 0.0
    %849 = vmatpush2.msra.mxu0 0.0
    %850 = vmatprep.subr.mxu0 0.0
    %851 = vmatpush2.msra.mxu0 0.0
    %852 = vmatprep.subr.mxu0 0.0
    %853 = vmatpush2.msra.mxu0 0.0
    %854 = vmatprep.subr.mxu0 0.0
    %855 = vmatpush2.msra.mxu0 0.0
    %856 = vmatprep.subr.mxu0 0.0
    %857 = vmatpush2.msra.mxu0 0.0
    %858 = vmatprep.subr.mxu0 0.0
    %859 = vmatpush2.msra.mxu0 0.0
    %860 = vmatprep.subr.mxu0 0.0
    %861 = vmatpush2.msra.mxu0 0.0
    %862 = vmatprep.subr.mxu0 0.0
    %863 = vmatpush2.msra.mxu0 0.0
    %864 = vmatprep.mubr.f32.mxu0 0.0
    %865 = vmatmul.mubr.f32.gmra.mxu0 %v798
    %v866 = vpop.f32.mrf.mxu0
    %v867 = vadd.f32 0.0, %v866
    %v868 = vpop.f32.mrf.mxu0
    %869 = vdwg.mxu0
    %v870 = vadd.f32 %v797, %v867
    %v871 = vtanh.pop %v870
    %v872 = vxor.u32 %v870, 2147483648
    %v873 = vmul.f32 %v872, 1.442695
    %v874 = vpow.pop %v873
    %v875 = vadd.f32 %v874, 1.0
    %v876 = vrcp.pop %v875
    %v877 = vmul.f32 1.0, %v876
    %v878 = vsel %vm106, %v871, %v877
    %v879 = vmul.f32 %v878, %v783
    %881 = vrot.lane.b32.xlu0 %v878, 64
    %v882 = vpop.permute.xlu0 %881
    %v884 = vmul.f32 %v878, %v882
    %886 = vrot.lane.b32.xlu0 %v884, 32
    %v887 = vpop.permute.xlu0 %886
    %v889 = vadd.f32 %v879, %v887
    %v890 = vtanh.pop %v889
    %892 = vrot.lane.b32.xlu0 %v890, 64
    %v893 = vpop.permute.xlu0 %892
    %v895 = vmul.f32 %v878, %v893
    %897 = vrot.lane.b32.xlu0 %v895, 32
    %v898 = vpop.permute.xlu0 %897
    %s900 = scalar_lea.vmem [#allocation2], 40
    %901 = vst.msk [vmem:[%s900] sm:$0xff] %vm267, %v898
    %s902 = scalar_lea.vmem [#allocation3], 48
    %v903 = vld [vmem:[%s902] sm:$0xff]
    %v904 = vsel %vm267, %v898, 0
    %906 = vmatprep.subr.mxu0 0.0
    %907 = vmatpush1.msra.mxu0 0.0
    %908 = vmatprep.subr.mxu0 0.0
    %909 = vmatpush1.msra.mxu0 0.0
    %910 = vmatprep.subr.mxu0 0.0
    %911 = vmatpush1.msra.mxu0 0.0
    %912 = vmatprep.subr.mxu0 0.0
    %913 = vmatpush1.msra.mxu0 0.0
    %914 = vmatprep.subr.mxu0 0.0
    %915 = vmatpush1.msra.mxu0 0.0
    %916 = vmatprep.subr.mxu0 0.0
    %917 = vmatpush1.msra.mxu0 0.0
    %918 = vmatprep.subr.mxu0 0.0
    %919 = vmatpush1.msra.mxu0 0.0
    %920 = vmatprep.subr.mxu0 0.0
    %921 = vmatpush1.msra.mxu0 0.0
    %922 = vmatprep.subr.mxu0 0.0
    %923 = vmatpush1.msra.mxu0 0.0
    %924 = vmatprep.subr.mxu0 0.0
    %925 = vmatpush1.msra.mxu0 0.0
    %926 = vmatprep.subr.mxu0 0.0
    %927 = vmatpush1.msra.mxu0 0.0
    %928 = vmatprep.subr.mxu0 0.0
    %929 = vmatpush1.msra.mxu0 0.0
    %930 = vmatprep.subr.mxu0 0.0
    %931 = vmatpush1.msra.mxu0 %v112
    %932 = vmatprep.subr.mxu0 0.0
    %933 = vmatpush1.msra.mxu0 %v111
    %934 = vmatprep.subr.mxu0 0.0
    %935 = vmatpush1.msra.mxu0 %v110
    %936 = vmatprep.subr.mxu0 0.0
    %937 = vmatpush1.msra.mxu0 %v109
    %938 = vmatprep.subr.mxu0 0.0
    %939 = vmatpush2.msra.mxu0 0.0
    %940 = vmatprep.subr.mxu0 0.0
    %941 = vmatpush2.msra.mxu0 0.0
    %942 = vmatprep.subr.mxu0 0.0
    %943 = vmatpush2.msra.mxu0 0.0
    %944 = vmatprep.subr.mxu0 0.0
    %945 = vmatpush2.msra.mxu0 0.0
    %946 = vmatprep.subr.mxu0 0.0
    %947 = vmatpush2.msra.mxu0 0.0
    %948 = vmatprep.subr.mxu0 0.0
    %949 = vmatpush2.msra.mxu0 0.0
    %950 = vmatprep.subr.mxu0 0.0
    %951 = vmatpush2.msra.mxu0 0.0
    %952 = vmatprep.subr.mxu0 0.0
    %953 = vmatpush2.msra.mxu0 0.0
    %954 = vmatprep.subr.mxu0 0.0
    %955 = vmatpush2.msra.mxu0 0.0
    %956 = vmatprep.subr.mxu0 0.0
    %957 = vmatpush2.msra.mxu0 0.0
    %958 = vmatprep.subr.mxu0 0.0
    %959 = vmatpush2.msra.mxu0 0.0
    %960 = vmatprep.subr.mxu0 0.0
    %961 = vmatpush2.msra.mxu0 0.0
    %962 = vmatprep.subr.mxu0 0.0
    %963 = vmatpush2.msra.mxu0 0.0
    %964 = vmatprep.subr.mxu0 0.0
    %965 = vmatpush2.msra.mxu0 0.0
    %966 = vmatprep.subr.mxu0 0.0
    %967 = vmatpush2.msra.mxu0 0.0
    %968 = vmatprep.subr.mxu0 0.0
    %969 = vmatpush2.msra.mxu0 0.0
    %970 = vmatprep.mubr.f32.mxu0 0.0
    %971 = vmatmul.mubr.f32.gmra.mxu0 %v904
    %v972 = vpop.f32.mrf.mxu0
    %v973 = vadd.f32 0.0, %v972
    %v974 = vpop.f32.mrf.mxu0
    %975 = vdwg.mxu0
    %v976 = vadd.f32 %v903, %v973
    %v977 = vtanh.pop %v976
    %v978 = vxor.u32 %v976, 2147483648
    %v979 = vmul.f32 %v978, 1.442695
    %v980 = vpow.pop %v979
    %v981 = vadd.f32 %v980, 1.0
    %v982 = vrcp.pop %v981
    %v983 = vmul.f32 1.0, %v982
    %v984 = vsel %vm106, %v977, %v983
    %v985 = vmul.f32 %v984, %v889
    %987 = vrot.lane.b32.xlu0 %v984, 64
    %v988 = vpop.permute.xlu0 %987
    %v990 = vmul.f32 %v984, %v988
    %992 = vrot.lane.b32.xlu0 %v990, 32
    %v993 = vpop.permute.xlu0 %992
    %v995 = vadd.f32 %v985, %v993
    %v996 = vtanh.pop %v995
    %998 = vrot.lane.b32.xlu0 %v996, 64
    %v999 = vpop.permute.xlu0 %998
    %v1001 = vmul.f32 %v984, %v999
    %1003 = vrot.lane.b32.xlu0 %v1001, 32
    %v1004 = vpop.permute.xlu0 %1003
    %s1006 = scalar_lea.vmem [#allocation2], 48
    %1007 = vst.msk [vmem:[%s1006] sm:$0xff] %vm267, %v1004
    %s1008 = scalar_lea.vmem [#allocation3], 56
    %v1009 = vld [vmem:[%s1008] sm:$0xff]
    %v1010 = vsel %vm267, %v1004, 0
    %1012 = vmatprep.subr.mxu0 0.0
    %1013 = vmatpush1.msra.mxu0 0.0
    %1014 = vmatprep.subr.mxu0 0.0
    %1015 = vmatpush1.msra.mxu0 0.0
    %1016 = vmatprep.subr.mxu0 0.0
    %1017 = vmatpush1.msra.mxu0 0.0
    %1018 = vmatprep.subr.mxu0 0.0
    %1019 = vmatpush1.msra.mxu0 0.0
    %1020 = vmatprep.subr.mxu0 0.0
    %1021 = vmatpush1.msra.mxu0 0.0
    %1022 = vmatprep.subr.mxu0 0.0
    %1023 = vmatpush1.msra.mxu0 0.0
    %1024 = vmatprep.subr.mxu0 0.0
    %1025 = vmatpush1.msra.mxu0 0.0
    %1026 = vmatprep.subr.mxu0 0.0
    %1027 = vmatpush1.msra.mxu0 0.0
    %1028 = vmatprep.subr.mxu0 0.0
    %1029 = vmatpush1.msra.mxu0 0.0
    %1030 = vmatprep.subr.mxu0 0.0
    %1031 = vmatpush1.msra.mxu0 0.0
    %1032 = vmatprep.subr.mxu0 0.0
    %1033 = vmatpush1.msra.mxu0 0.0
    %1034 = vmatprep.subr.mxu0 0.0
    %1035 = vmatpush1.msra.mxu0 0.0
    %1036 = vmatprep.subr.mxu0 0.0
    %1037 = vmatpush1.msra.mxu0 %v112
    %1038 = vmatprep.subr.mxu0 0.0
    %1039 = vmatpush1.msra.mxu0 %v111
    %1040 = vmatprep.subr.mxu0 0.0
    %1041 = vmatpush1.msra.mxu0 %v110
    %1042 = vmatprep.subr.mxu0 0.0
    %1043 = vmatpush1.msra.mxu0 %v109
    %1044 = vmatprep.subr.mxu0 0.0
    %1045 = vmatpush2.msra.mxu0 0.0
    %1046 = vmatprep.subr.mxu0 0.0
    %1047 = vmatpush2.msra.mxu0 0.0
    %1048 = vmatprep.subr.mxu0 0.0
    %1049 = vmatpush2.msra.mxu0 0.0
    %1050 = vmatprep.subr.mxu0 0.0
    %1051 = vmatpush2.msra.mxu0 0.0
    %1052 = vmatprep.subr.mxu0 0.0
    %1053 = vmatpush2.msra.mxu0 0.0
    %1054 = vmatprep.subr.mxu0 0.0
    %1055 = vmatpush2.msra.mxu0 0.0
    %1056 = vmatprep.subr.mxu0 0.0
    %1057 = vmatpush2.msra.mxu0 0.0
    %1058 = vmatprep.subr.mxu0 0.0
    %1059 = vmatpush2.msra.mxu0 0.0
    %1060 = vmatprep.subr.mxu0 0.0
    %1061 = vmatpush2.msra.mxu0 0.0
    %1062 = vmatprep.subr.mxu0 0.0
    %1063 = vmatpush2.msra.mxu0 0.0
    %1064 = vmatprep.subr.mxu0 0.0
    %1065 = vmatpush2.msra.mxu0 0.0
    %1066 = vmatprep.subr.mxu0 0.0
    %1067 = vmatpush2.msra.mxu0 0.0
    %1068 = vmatprep.subr.mxu0 0.0
    %1069 = vmatpush2.msra.mxu0 0.0
    %1070 = vmatprep.subr.mxu0 0.0
    %1071 = vmatpush2.msra.mxu0 0.0
    %1072 = vmatprep.subr.mxu0 0.0
    %1073 = vmatpush2.msra.mxu0 0.0
    %1074 = vmatprep.subr.mxu0 0.0
    %1075 = vmatpush2.msra.mxu0 0.0
    %1076 = vmatprep.mubr.f32.mxu0 0.0
    %1077 = vmatmul.mubr.f32.gmra.mxu0 %v1010
    %v1078 = vpop.f32.mrf.mxu0
    %v1079 = vadd.f32 0.0, %v1078
    %v1080 = vpop.f32.mrf.mxu0
    %1081 = vdwg.mxu0
    %v1082 = vadd.f32 %v1009, %v1079
    %v1083 = vtanh.pop %v1082
    %v1084 = vxor.u32 %v1082, 2147483648
    %v1085 = vmul.f32 %v1084, 1.442695
    %v1086 = vpow.pop %v1085
    %v1087 = vadd.f32 %v1086, 1.0
    %v1088 = vrcp.pop %v1087
    %v1089 = vmul.f32 1.0, %v1088
    %v1090 = vsel %vm106, %v1083, %v1089
    %v1091 = vmul.f32 %v1090, %v995
    %1093 = vrot.lane.b32.xlu0 %v1090, 64
    %v1094 = vpop.permute.xlu0 %1093
    %v1096 = vmul.f32 %v1090, %v1094
    %1098 = vrot.lane.b32.xlu0 %v1096, 32
    %v1099 = vpop.permute.xlu0 %1098
    %v1101 = vadd.f32 %v1091, %v1099
    %v1102 = vtanh.pop %v1101
    %1104 = vrot.lane.b32.xlu0 %v1102, 64
    %v1105 = vpop.permute.xlu0 %1104
    %v1107 = vmul.f32 %v1090, %v1105
    %1109 = vrot.lane.b32.xlu0 %v1107, 32
    %v1110 = vpop.permute.xlu0 %1109
    %s1112 = scalar_lea.vmem [#allocation2], 56
    %1113 = vst.msk [vmem:[%s1112] sm:$0xff] %vm267, %v1110
    %v1114 = vld [vmem:[#allocation10] sm:$0xff]
    %v1115 = vld [vmem:[#allocation10 + $0x8] sm:$0xff]
    %v1116 = vld [vmem:[#allocation10 + $0x10] sm:$0xff]
    %v1117 = vld [vmem:[#allocation10 + $0x18] sm:$0xff]
    %v1118 = vld [vmem:[#allocation12] sm:$0xff]
    %v1119 = vld [vmem:[#allocation12 + $0x8] sm:$0xff]
    %v1120 = vld [vmem:[#allocation12 + $0x10] sm:$0xff]
    %v1121 = vld [vmem:[#allocation12 + $0x18] sm:$0xff]
    %v1122 = vld [vmem:[%s6] sm:$0x1]
    %v1123 = vld [vmem:[#allocation2] sm:$0xff]
    %v1124 = vld [vmem:[#allocation2 + $0x8] sm:$0xff]
    %v1125 = vld [vmem:[#allocation2 + $0x10] sm:$0xff]
    %v1126 = vld [vmem:[#allocation2 + $0x18] sm:$0xff]
    %v1127 = vld [vmem:[#allocation2 + $0x20] sm:$0xff]
    %v1128 = vld [vmem:[#allocation2 + $0x28] sm:$0xff]
    %v1129 = vld [vmem:[#allocation2 + $0x30] sm:$0xff]
    %v1130 = vld [vmem:[#allocation2 + $0x38] sm:$0xff]
    %v1132 = vlaneseq
    %v1133 = vshrl.u32 %v1132, 7
    %v1134 = vsub.s32 0, %v1133
    %v1135 = vrot.slane %v1122, %v1134
    %v1138 = vsel %vm267, %v1123, 0
    %v1141 = vsel %vm267, %v1124, 0
    %v1144 = vsel %vm267, %v1125, 0
    %v1147 = vsel %vm267, %v1126, 0
    %v1150 = vsel %vm267, %v1127, 0
    %v1153 = vsel %vm267, %v1128, 0
    %v1156 = vsel %vm267, %v1129, 0
    %v1159 = vsel %vm267, %v1130, 0
    %1161 = vmatprep.subr.mxu0 0.0
    %1162 = vmatpush1.msra.mxu0 0.0
    %1163 = vmatprep.subr.mxu0 0.0
    %1164 = vmatpush1.msra.mxu0 0.0
    %1165 = vmatprep.subr.mxu0 0.0
    %1166 = vmatpush1.msra.mxu0 0.0
    %1167 = vmatprep.subr.mxu0 0.0
    %1168 = vmatpush1.msra.mxu0 0.0
    %1169 = vmatprep.subr.mxu0 0.0
    %1170 = vmatpush1.msra.mxu0 0.0
    %1171 = vmatprep.subr.mxu0 0.0
    %1172 = vmatpush1.msra.mxu0 0.0
    %1173 = vmatprep.subr.mxu0 0.0
    %1174 = vmatpush1.msra.mxu0 0.0
    %1175 = vmatprep.subr.mxu0 0.0
    %1176 = vmatpush1.msra.mxu0 0.0
    %1177 = vmatprep.subr.mxu0 0.0
    %1178 = vmatpush1.msra.mxu0 0.0
    %1179 = vmatprep.subr.mxu0 0.0
    %1180 = vmatpush1.msra.mxu0 0.0
    %1181 = vmatprep.subr.mxu0 0.0
    %1182 = vmatpush1.msra.mxu0 0.0
    %1183 = vmatprep.subr.mxu0 0.0
    %1184 = vmatpush1.msra.mxu0 0.0
    %1185 = vmatprep.subr.mxu0 0.0
    %1186 = vmatpush1.msra.mxu0 %v1117
    %1187 = vmatprep.subr.mxu0 0.0
    %1188 = vmatpush1.msra.mxu0 %v1116
    %1189 = vmatprep.subr.mxu0 0.0
    %1190 = vmatpush1.msra.mxu0 %v1115
    %1191 = vmatprep.subr.mxu0 0.0
    %1192 = vmatpush1.msra.mxu0 %v1114
    %1193 = vmatprep.subr.mxu0 0.0
    %1194 = vmatpush2.msra.mxu0 0.0
    %1195 = vmatprep.subr.mxu0 0.0
    %1196 = vmatpush2.msra.mxu0 0.0
    %1197 = vmatprep.subr.mxu0 0.0
    %1198 = vmatpush2.msra.mxu0 0.0
    %1199 = vmatprep.subr.mxu0 0.0
    %1200 = vmatpush2.msra.mxu0 0.0
    %1201 = vmatprep.subr.mxu0 0.0
    %1202 = vmatpush2.msra.mxu0 0.0
    %1203 = vmatprep.subr.mxu0 0.0
    %1204 = vmatpush2.msra.mxu0 0.0
    %1205 = vmatprep.subr.mxu0 0.0
    %1206 = vmatpush2.msra.mxu0 0.0
    %1207 = vmatprep.subr.mxu0 0.0
    %1208 = vmatpush2.msra.mxu0 0.0
    %1209 = vmatprep.subr.mxu0 0.0
    %1210 = vmatpush2.msra.mxu0 0.0
    %1211 = vmatprep.subr.mxu0 0.0
    %1212 = vmatpush2.msra.mxu0 0.0
    %1213 = vmatprep.subr.mxu0 0.0
    %1214 = vmatpush2.msra.mxu0 0.0
    %1215 = vmatprep.subr.mxu0 0.0
    %1216 = vmatpush2.msra.mxu0 0.0
    %1217 = vmatprep.subr.mxu0 0.0
    %1218 = vmatpush2.msra.mxu0 0.0
    %1219 = vmatprep.subr.mxu0 0.0
    %1220 = vmatpush2.msra.mxu0 0.0
    %1221 = vmatprep.subr.mxu0 0.0
    %1222 = vmatpush2.msra.mxu0 0.0
    %1223 = vmatprep.subr.mxu0 0.0
    %1224 = vmatpush2.msra.mxu0 0.0
    %1225 = vmatprep.mubr.f32.mxu0 0.0
    %1226 = vmatmul.mubr.f32.gmra.mxu0 %v1138
    %v1227 = vpop.f32.mrf.mxu0
    %v1228 = vadd.f32 %v1135, %v1227
    %v1229 = vpop.f32.mrf.mxu0
    %1230 = vmatprep.mubr.f32.mxu0 0.0
    %1231 = vmatmul.mubr.f32.gmra.mxu0 %v1141
    %v1232 = vpop.f32.mrf.mxu0
    %v1233 = vadd.f32 %v1135, %v1232
    %v1234 = vpop.f32.mrf.mxu0
    %1235 = vmatprep.mubr.f32.mxu0 0.0
    %1236 = vmatmul.mubr.f32.gmra.mxu0 %v1144
    %v1237 = vpop.f32.mrf.mxu0
    %v1238 = vadd.f32 %v1135, %v1237
    %v1239 = vpop.f32.mrf.mxu0
    %1240 = vmatprep.mubr.f32.mxu0 0.0
    %1241 = vmatmul.mubr.f32.gmra.mxu0 %v1147
    %v1242 = vpop.f32.mrf.mxu0
    %v1243 = vadd.f32 %v1135, %v1242
    %v1244 = vpop.f32.mrf.mxu0
    %1245 = vmatprep.mubr.f32.mxu0 0.0
    %1246 = vmatmul.mubr.f32.gmra.mxu0 %v1150
    %v1247 = vpop.f32.mrf.mxu0
    %v1248 = vadd.f32 %v1135, %v1247
    %v1249 = vpop.f32.mrf.mxu0
    %1250 = vmatprep.mubr.f32.mxu0 0.0
    %1251 = vmatmul.mubr.f32.gmra.mxu0 %v1153
    %v1252 = vpop.f32.mrf.mxu0
    %v1253 = vadd.f32 %v1135, %v1252
    %v1254 = vpop.f32.mrf.mxu0
    %1255 = vmatprep.mubr.f32.mxu0 0.0
    %1256 = vmatmul.mubr.f32.gmra.mxu0 %v1156
    %v1257 = vpop.f32.mrf.mxu0
    %v1258 = vadd.f32 %v1135, %v1257
    %v1259 = vpop.f32.mrf.mxu0
    %1260 = vmatprep.mubr.f32.mxu0 0.0
    %1261 = vmatmul.mubr.f32.gmra.mxu0 %v1159
    %v1262 = vpop.f32.mrf.mxu0
    %v1263 = vadd.f32 %v1135, %v1262
    %v1264 = vpop.f32.mrf.mxu0
    %1265 = vdwg.mxu0
    %1266 = vst [vmem:[#allocation3] sm:$0xff] %v1228
    %1267 = vst [vmem:[#allocation3 + $0x8] sm:$0xff] %v1233
    %1268 = vst [vmem:[#allocation3 + $0x10] sm:$0xff] %v1238
    %1269 = vst [vmem:[#allocation3 + $0x18] sm:$0xff] %v1243
    %1270 = vst [vmem:[#allocation3 + $0x20] sm:$0xff] %v1248
    %1271 = vst [vmem:[#allocation3 + $0x28] sm:$0xff] %v1253
    %1272 = vst [vmem:[#allocation3 + $0x30] sm:$0xff] %v1258
    %1273 = vst [vmem:[#allocation3 + $0x38] sm:$0xff] %v1263
    %v1274 = vld [vmem:[#allocation3] sm:$0xff]
    %1275 = vmatprep.subr.mxu0 0.0
    %1276 = vmatpush1.msra.mxu0 0.0
    %1277 = vmatprep.subr.mxu0 0.0
    %1278 = vmatpush1.msra.mxu0 0.0
    %1279 = vmatprep.subr.mxu0 0.0
    %1280 = vmatpush1.msra.mxu0 0.0
    %1281 = vmatprep.subr.mxu0 0.0
    %1282 = vmatpush1.msra.mxu0 0.0
    %1283 = vmatprep.subr.mxu0 0.0
    %1284 = vmatpush1.msra.mxu0 0.0
    %1285 = vmatprep.subr.mxu0 0.0
    %1286 = vmatpush1.msra.mxu0 0.0
    %1287 = vmatprep.subr.mxu0 0.0
    %1288 = vmatpush1.msra.mxu0 0.0
    %1289 = vmatprep.subr.mxu0 0.0
    %1290 = vmatpush1.msra.mxu0 0.0
    %1291 = vmatprep.subr.mxu0 0.0
    %1292 = vmatpush1.msra.mxu0 0.0
    %1293 = vmatprep.subr.mxu0 0.0
    %1294 = vmatpush1.msra.mxu0 0.0
    %1295 = vmatprep.subr.mxu0 0.0
    %1296 = vmatpush1.msra.mxu0 0.0
    %1297 = vmatprep.subr.mxu0 0.0
    %1298 = vmatpush1.msra.mxu0 0.0
    %1299 = vmatprep.subr.mxu0 0.0
    %1300 = vmatpush1.msra.mxu0 %v1121
    %1301 = vmatprep.subr.mxu0 0.0
    %1302 = vmatpush1.msra.mxu0 %v1120
    %1303 = vmatprep.subr.mxu0 0.0
    %1304 = vmatpush1.msra.mxu0 %v1119
    %1305 = vmatprep.subr.mxu0 0.0
    %1306 = vmatpush1.msra.mxu0 %v1118
    %1307 = vmatprep.subr.mxu0 0.0
    %1308 = vmatpush2.msra.mxu0 0.0
    %1309 = vmatprep.subr.mxu0 0.0
    %1310 = vmatpush2.msra.mxu0 0.0
    %1311 = vmatprep.subr.mxu0 0.0
    %1312 = vmatpush2.msra.mxu0 0.0
    %1313 = vmatprep.subr.mxu0 0.0
    %1314 = vmatpush2.msra.mxu0 0.0
    %1315 = vmatprep.subr.mxu0 0.0
    %1316 = vmatpush2.msra.mxu0 0.0
    %1317 = vmatprep.subr.mxu0 0.0
    %1318 = vmatpush2.msra.mxu0 0.0
    %1319 = vmatprep.subr.mxu0 0.0
    %1320 = vmatpush2.msra.mxu0 0.0
    %1321 = vmatprep.subr.mxu0 0.0
    %1322 = vmatpush2.msra.mxu0 0.0
    %1323 = vmatprep.subr.mxu0 0.0
    %1324 = vmatpush2.msra.mxu0 0.0
    %1325 = vmatprep.subr.mxu0 0.0
    %1326 = vmatpush2.msra.mxu0 0.0
    %1327 = vmatprep.subr.mxu0 0.0
    %1328 = vmatpush2.msra.mxu0 0.0
    %1329 = vmatprep.subr.mxu0 0.0
    %1330 = vmatpush2.msra.mxu0 0.0
    %1331 = vmatprep.subr.mxu0 0.0
    %1332 = vmatpush2.msra.mxu0 0.0
    %1333 = vmatprep.subr.mxu0 0.0
    %1334 = vmatpush2.msra.mxu0 0.0
    %1335 = vmatprep.subr.mxu0 0.0
    %1336 = vmatpush2.msra.mxu0 0.0
    %1337 = vmatprep.subr.mxu0 0.0
    %1338 = vmatpush2.msra.mxu0 0.0
    %1339 = vmatprep.mubr.f32.mxu0 0.0
    %1340 = vmatmul.mubr.f32.gmra.mxu0 %v269
    %v1341 = vpop.f32.mrf.mxu0
    %v1342 = vadd.f32 0.0, %v1341
    %v1343 = vpop.f32.mrf.mxu0
    %1344 = vdwg.mxu0
    %v1345 = vadd.f32 %v1274, %v1342
    %v1346 = vtanh.pop %v1345
    %v1347 = vxor.u32 %v1345, 2147483648
    %v1348 = vmul.f32 %v1347, 1.442695
    %v1349 = vpow.pop %v1348
    %v1350 = vadd.f32 %v1349, 1.0
    %v1351 = vrcp.pop %v1350
    %v1352 = vmul.f32 1.0, %v1351
    %v1353 = vsel %vm106, %v1346, %v1352
    %v1354 = vmul.f32 %v1353, 0.0
    %1356 = vrot.lane.b32.xlu0 %v1353, 64
    %v1357 = vpop.permute.xlu0 %1356
    %v1359 = vmul.f32 %v1353, %v1357
    %1361 = vrot.lane.b32.xlu0 %v1359, 32
    %v1362 = vpop.permute.xlu0 %1361
    %v1364 = vadd.f32 %v1354, %v1362
    %v1365 = vtanh.pop %v1364
    %1367 = vrot.lane.b32.xlu0 %v1365, 64
    %v1368 = vpop.permute.xlu0 %1367
    %v1370 = vmul.f32 %v1353, %v1368
    %v1371 = vld [vmem:[%s372] sm:$0xff]
    %1373 = vrot.lane.b32.xlu0 %v1370, 32
    %v1374 = vpop.permute.xlu0 %1373
    %v1375 = vsel %vm267, %v1374, 0
    %1377 = vmatprep.subr.mxu0 0.0
    %1378 = vmatpush1.msra.mxu0 0.0
    %1379 = vmatprep.subr.mxu0 0.0
    %1380 = vmatpush1.msra.mxu0 0.0
    %1381 = vmatprep.subr.mxu0 0.0
    %1382 = vmatpush1.msra.mxu0 0.0
    %1383 = vmatprep.subr.mxu0 0.0
    %1384 = vmatpush1.msra.mxu0 0.0
    %1385 = vmatprep.subr.mxu0 0.0
    %1386 = vmatpush1.msra.mxu0 0.0
    %1387 = vmatprep.subr.mxu0 0.0
    %1388 = vmatpush1.msra.mxu0 0.0
    %1389 = vmatprep.subr.mxu0 0.0
    %1390 = vmatpush1.msra.mxu0 0.0
    %1391 = vmatprep.subr.mxu0 0.0
    %1392 = vmatpush1.msra.mxu0 0.0
    %1393 = vmatprep.subr.mxu0 0.0
    %1394 = vmatpush1.msra.mxu0 0.0
    %1395 = vmatprep.subr.mxu0 0.0
    %1396 = vmatpush1.msra.mxu0 0.0
    %1397 = vmatprep.subr.mxu0 0.0
    %1398 = vmatpush1.msra.mxu0 0.0
    %1399 = vmatprep.subr.mxu0 0.0
    %1400 = vmatpush1.msra.mxu0 0.0
    %1401 = vmatprep.subr.mxu0 0.0
    %1402 = vmatpush1.msra.mxu0 %v1121
    %1403 = vmatprep.subr.mxu0 0.0
    %1404 = vmatpush1.msra.mxu0 %v1120
    %1405 = vmatprep.subr.mxu0 0.0
    %1406 = vmatpush1.msra.mxu0 %v1119
    %1407 = vmatprep.subr.mxu0 0.0
    %1408 = vmatpush1.msra.mxu0 %v1118
    %1409 = vmatprep.subr.mxu0 0.0
    %1410 = vmatpush2.msra.mxu0 0.0
    %1411 = vmatprep.subr.mxu0 0.0
    %1412 = vmatpush2.msra.mxu0 0.0
    %1413 = vmatprep.subr.mxu0 0.0
    %1414 = vmatpush2.msra.mxu0 0.0
    %1415 = vmatprep.subr.mxu0 0.0
    %1416 = vmatpush2.msra.mxu0 0.0
    %1417 = vmatprep.subr.mxu0 0.0
    %1418 = vmatpush2.msra.mxu0 0.0
    %1419 = vmatprep.subr.mxu0 0.0
    %1420 = vmatpush2.msra.mxu0 0.0
    %1421 = vmatprep.subr.mxu0 0.0
    %1422 = vmatpush2.msra.mxu0 0.0
    %1423 = vmatprep.subr.mxu0 0.0
    %1424 = vmatpush2.msra.mxu0 0.0
    %1425 = vmatprep.subr.mxu0 0.0
    %1426 = vmatpush2.msra.mxu0 0.0
    %1427 = vmatprep.subr.mxu0 0.0
    %1428 = vmatpush2.msra.mxu0 0.0
    %1429 = vmatprep.subr.mxu0 0.0
    %1430 = vmatpush2.msra.mxu0 0.0
    %1431 = vmatprep.subr.mxu0 0.0
    %1432 = vmatpush2.msra.mxu0 0.0
    %1433 = vmatprep.subr.mxu0 0.0
    %1434 = vmatpush2.msra.mxu0 0.0
    %1435 = vmatprep.subr.mxu0 0.0
    %1436 = vmatpush2.msra.mxu0 0.0
    %1437 = vmatprep.subr.mxu0 0.0
    %1438 = vmatpush2.msra.mxu0 0.0
    %1439 = vmatprep.subr.mxu0 0.0
    %1440 = vmatpush2.msra.mxu0 0.0
    %1441 = vmatprep.mubr.f32.mxu0 0.0
    %1442 = vmatmul.mubr.f32.gmra.mxu0 %v1375
    %v1443 = vpop.f32.mrf.mxu0
    %v1444 = vadd.f32 0.0, %v1443
    %v1445 = vpop.f32.mrf.mxu0
    %1446 = vdwg.mxu0
    %v1447 = vadd.f32 %v1371, %v1444
    %v1448 = vtanh.pop %v1447
    %v1449 = vxor.u32 %v1447, 2147483648
    %v1450 = vmul.f32 %v1449, 1.442695
    %v1451 = vpow.pop %v1450
    %v1452 = vadd.f32 %v1451, 1.0
    %v1453 = vrcp.pop %v1452
    %v1454 = vmul.f32 1.0, %v1453
    %v1455 = vsel %vm106, %v1448, %v1454
    %v1456 = vmul.f32 %v1455, %v1364
    %1458 = vrot.lane.b32.xlu0 %v1455, 64
    %v1459 = vpop.permute.xlu0 %1458
    %v1461 = vmul.f32 %v1455, %v1459
    %1463 = vrot.lane.b32.xlu0 %v1461, 32
    %v1464 = vpop.permute.xlu0 %1463
    %v1466 = vadd.f32 %v1456, %v1464
    %v1467 = vtanh.pop %v1466
    %1469 = vrot.lane.b32.xlu0 %v1467, 64
    %v1470 = vpop.permute.xlu0 %1469
    %v1472 = vmul.f32 %v1455, %v1470
    %v1473 = vld [vmem:[%s478] sm:$0xff]
    %1475 = vrot.lane.b32.xlu0 %v1472, 32
    %v1476 = vpop.permute.xlu0 %1475
    %v1477 = vsel %vm267, %v1476, 0
    %1479 = vmatprep.subr.mxu0 0.0
    %1480 = vmatpush1.msra.mxu0 0.0
    %1481 = vmatprep.subr.mxu0 0.0
    %1482 = vmatpush1.msra.mxu0 0.0
    %1483 = vmatprep.subr.mxu0 0.0
    %1484 = vmatpush1.msra.mxu0 0.0
    %1485 = vmatprep.subr.mxu0 0.0
    %1486 = vmatpush1.msra.mxu0 0.0
    %1487 = vmatprep.subr.mxu0 0.0
    %1488 = vmatpush1.msra.mxu0 0.0
    %1489 = vmatprep.subr.mxu0 0.0
    %1490 = vmatpush1.msra.mxu0 0.0
    %1491 = vmatprep.subr.mxu0 0.0
    %1492 = vmatpush1.msra.mxu0 0.0
    %1493 = vmatprep.subr.mxu0 0.0
    %1494 = vmatpush1.msra.mxu0 0.0
    %1495 = vmatprep.subr.mxu0 0.0
    %1496 = vmatpush1.msra.mxu0 0.0
    %1497 = vmatprep.subr.mxu0 0.0
    %1498 = vmatpush1.msra.mxu0 0.0
    %1499 = vmatprep.subr.mxu0 0.0
    %1500 = vmatpush1.msra.mxu0 0.0
    %1501 = vmatprep.subr.mxu0 0.0
    %1502 = vmatpush1.msra.mxu0 0.0
    %1503 = vmatprep.subr.mxu0 0.0
    %1504 = vmatpush1.msra.mxu0 %v1121
    %1505 = vmatprep.subr.mxu0 0.0
    %1506 = vmatpush1.msra.mxu0 %v1120
    %1507 = vmatprep.subr.mxu0 0.0
    %1508 = vmatpush1.msra.mxu0 %v1119
    %1509 = vmatprep.subr.mxu0 0.0
    %1510 = vmatpush1.msra.mxu0 %v1118
    %1511 = vmatprep.subr.mxu0 0.0
    %1512 = vmatpush2.msra.mxu0 0.0
    %1513 = vmatprep.subr.mxu0 0.0
    %1514 = vmatpush2.msra.mxu0 0.0
    %1515 = vmatprep.subr.mxu0 0.0
    %1516 = vmatpush2.msra.mxu0 0.0
    %1517 = vmatprep.subr.mxu0 0.0
    %1518 = vmatpush2.msra.mxu0 0.0
    %1519 = vmatprep.subr.mxu0 0.0
    %1520 = vmatpush2.msra.mxu0 0.0
    %1521 = vmatprep.subr.mxu0 0.0
    %1522 = vmatpush2.msra.mxu0 0.0
    %1523 = vmatprep.subr.mxu0 0.0
    %1524 = vmatpush2.msra.mxu0 0.0
    %1525 = vmatprep.subr.mxu0 0.0
    %1526 = vmatpush2.msra.mxu0 0.0
    %1527 = vmatprep.subr.mxu0 0.0
    %1528 = vmatpush2.msra.mxu0 0.0
    %1529 = vmatprep.subr.mxu0 0.0
    %1530 = vmatpush2.msra.mxu0 0.0
    %1531 = vmatprep.subr.mxu0 0.0
    %1532 = vmatpush2.msra.mxu0 0.0
    %1533 = vmatprep.subr.mxu0 0.0
    %1534 = vmatpush2.msra.mxu0 0.0
    %1535 = vmatprep.subr.mxu0 0.0
    %1536 = vmatpush2.msra.mxu0 0.0
    %1537 = vmatprep.subr.mxu0 0.0
    %1538 = vmatpush2.msra.mxu0 0.0
    %1539 = vmatprep.subr.mxu0 0.0
    %1540 = vmatpush2.msra.mxu0 0.0
    %1541 = vmatprep.subr.mxu0 0.0
    %1542 = vmatpush2.msra.mxu0 0.0
    %1543 = vmatprep.mubr.f32.mxu0 0.0
    %1544 = vmatmul.mubr.f32.gmra.mxu0 %v1477
    %v1545 = vpop.f32.mrf.mxu0
    %v1546 = vadd.f32 0.0, %v1545
    %v1547 = vpop.f32.mrf.mxu0
    %1548 = vdwg.mxu0
    %v1549 = vadd.f32 %v1473, %v1546
    %v1550 = vtanh.pop %v1549
    %v1551 = vxor.u32 %v1549, 2147483648
    %v1552 = vmul.f32 %v1551, 1.442695
    %v1553 = vpow.pop %v1552
    %v1554 = vadd.f32 %v1553, 1.0
    %v1555 = vrcp.pop %v1554
    %v1556 = vmul.f32 1.0, %v1555
    %v1557 = vsel %vm106, %v1550, %v1556
    %v1558 = vmul.f32 %v1557, %v1466
    %1560 = vrot.lane.b32.xlu0 %v1557, 64
    %v1561 = vpop.permute.xlu0 %1560
    %v1563 = vmul.f32 %v1557, %v1561
    %1565 = vrot.lane.b32.xlu0 %v1563, 32
    %v1566 = vpop.permute.xlu0 %1565
    %v1568 = vadd.f32 %v1558, %v1566
    %v1569 = vtanh.pop %v1568
    %1571 = vrot.lane.b32.xlu0 %v1569, 64
    %v1572 = vpop.permute.xlu0 %1571
    %v1574 = vmul.f32 %v1557, %v1572
    %v1575 = vld [vmem:[%s584] sm:$0xff]
    %1577 = vrot.lane.b32.xlu0 %v1574, 32
    %v1578 = vpop.permute.xlu0 %1577
    %v1579 = vsel %vm267, %v1578, 0
    %1581 = vmatprep.subr.mxu0 0.0
    %1582 = vmatpush1.msra.mxu0 0.0
    %1583 = vmatprep.subr.mxu0 0.0
    %1584 = vmatpush1.msra.mxu0 0.0
    %1585 = vmatprep.subr.mxu0 0.0
    %1586 = vmatpush1.msra.mxu0 0.0
    %1587 = vmatprep.subr.mxu0 0.0
    %1588 = vmatpush1.msra.mxu0 0.0
    %1589 = vmatprep.subr.mxu0 0.0
    %1590 = vmatpush1.msra.mxu0 0.0
    %1591 = vmatprep.subr.mxu0 0.0
    %1592 = vmatpush1.msra.mxu0 0.0
    %1593 = vmatprep.subr.mxu0 0.0
    %1594 = vmatpush1.msra.mxu0 0.0
    %1595 = vmatprep.subr.mxu0 0.0
    %1596 = vmatpush1.msra.mxu0 0.0
    %1597 = vmatprep.subr.mxu0 0.0
    %1598 = vmatpush1.msra.mxu0 0.0
    %1599 = vmatprep.subr.mxu0 0.0
    %1600 = vmatpush1.msra.mxu0 0.0
    %1601 = vmatprep.subr.mxu0 0.0
    %1602 = vmatpush1.msra.mxu0 0.0
    %1603 = vmatprep.subr.mxu0 0.0
    %1604 = vmatpush1.msra.mxu0 0.0
    %1605 = vmatprep.subr.mxu0 0.0
    %1606 = vmatpush1.msra.mxu0 %v1121
    %1607 = vmatprep.subr.mxu0 0.0
    %1608 = vmatpush1.msra.mxu0 %v1120
    %1609 = vmatprep.subr.mxu0 0.0
    %1610 = vmatpush1.msra.mxu0 %v1119
    %1611 = vmatprep.subr.mxu0 0.0
    %1612 = vmatpush1.msra.mxu0 %v1118
    %1613 = vmatprep.subr.mxu0 0.0
    %1614 = vmatpush2.msra.mxu0 0.0
    %1615 = vmatprep.subr.mxu0 0.0
    %1616 = vmatpush2.msra.mxu0 0.0
    %1617 = vmatprep.subr.mxu0 0.0
    %1618 = vmatpush2.msra.mxu0 0.0
    %1619 = vmatprep.subr.mxu0 0.0
    %1620 = vmatpush2.msra.mxu0 0.0
    %1621 = vmatprep.subr.mxu0 0.0
    %1622 = vmatpush2.msra.mxu0 0.0
    %1623 = vmatprep.subr.mxu0 0.0
    %1624 = vmatpush2.msra.mxu0 0.0
    %1625 = vmatprep.subr.mxu0 0.0
    %1626 = vmatpush2.msra.mxu0 0.0
    %1627 = vmatprep.subr.mxu0 0.0
    %1628 = vmatpush2.msra.mxu0 0.0
    %1629 = vmatprep.subr.mxu0 0.0
    %1630 = vmatpush2.msra.mxu0 0.0
    %1631 = vmatprep.subr.mxu0 0.0
    %1632 = vmatpush2.msra.mxu0 0.0
    %1633 = vmatprep.subr.mxu0 0.0
    %1634 = vmatpush2.msra.mxu0 0.0
    %1635 = vmatprep.subr.mxu0 0.0
    %1636 = vmatpush2.msra.mxu0 0.0
    %1637 = vmatprep.subr.mxu0 0.0
    %1638 = vmatpush2.msra.mxu0 0.0
    %1639 = vmatprep.subr.mxu0 0.0
    %1640 = vmatpush2.msra.mxu0 0.0
    %1641 = vmatprep.subr.mxu0 0.0
    %1642 = vmatpush2.msra.mxu0 0.0
    %1643 = vmatprep.subr.mxu0 0.0
    %1644 = vmatpush2.msra.mxu0 0.0
    %1645 = vmatprep.mubr.f32.mxu0 0.0
    %1646 = vmatmul.mubr.f32.gmra.mxu0 %v1579
    %v1647 = vpop.f32.mrf.mxu0
    %v1648 = vadd.f32 0.0, %v1647
    %v1649 = vpop.f32.mrf.mxu0
    %1650 = vdwg.mxu0
    %v1651 = vadd.f32 %v1575, %v1648
    %v1652 = vtanh.pop %v1651
    %v1653 = vxor.u32 %v1651, 2147483648
    %v1654 = vmul.f32 %v1653, 1.442695
    %v1655 = vpow.pop %v1654
    %v1656 = vadd.f32 %v1655, 1.0
    %v1657 = vrcp.pop %v1656
    %v1658 = vmul.f32 1.0, %v1657
    %v1659 = vsel %vm106, %v1652, %v1658
    %v1660 = vmul.f32 %v1659, %v1568
    %1662 = vrot.lane.b32.xlu0 %v1659, 64
    %v1663 = vpop.permute.xlu0 %1662
    %v1665 = vmul.f32 %v1659, %v1663
    %1667 = vrot.lane.b32.xlu0 %v1665, 32
    %v1668 = vpop.permute.xlu0 %1667
    %v1670 = vadd.f32 %v1660, %v1668
    %v1671 = vtanh.pop %v1670
    %1673 = vrot.lane.b32.xlu0 %v1671, 64
    %v1674 = vpop.permute.xlu0 %1673
    %v1676 = vmul.f32 %v1659, %v1674
    %v1677 = vld [vmem:[%s690] sm:$0xff]
    %1679 = vrot.lane.b32.xlu0 %v1676, 32
    %v1680 = vpop.permute.xlu0 %1679
    %v1681 = vsel %vm267, %v1680, 0
    %1683 = vmatprep.subr.mxu0 0.0
    %1684 = vmatpush1.msra.mxu0 0.0
    %1685 = vmatprep.subr.mxu0 0.0
    %1686 = vmatpush1.msra.mxu0 0.0
    %1687 = vmatprep.subr.mxu0 0.0
    %1688 = vmatpush1.msra.mxu0 0.0
    %1689 = vmatprep.subr.mxu0 0.0
    %1690 = vmatpush1.msra.mxu0 0.0
    %1691 = vmatprep.subr.mxu0 0.0
    %1692 = vmatpush1.msra.mxu0 0.0
    %1693 = vmatprep.subr.mxu0 0.0
    %1694 = vmatpush1.msra.mxu0 0.0
    %1695 = vmatprep.subr.mxu0 0.0
    %1696 = vmatpush1.msra.mxu0 0.0
    %1697 = vmatprep.subr.mxu0 0.0
    %1698 = vmatpush1.msra.mxu0 0.0
    %1699 = vmatprep.subr.mxu0 0.0
    %1700 = vmatpush1.msra.mxu0 0.0
    %1701 = vmatprep.subr.mxu0 0.0
    %1702 = vmatpush1.msra.mxu0 0.0
    %1703 = vmatprep.subr.mxu0 0.0
    %1704 = vmatpush1.msra.mxu0 0.0
    %1705 = vmatprep.subr.mxu0 0.0
    %1706 = vmatpush1.msra.mxu0 0.0
    %1707 = vmatprep.subr.mxu0 0.0
    %1708 = vmatpush1.msra.mxu0 %v1121
    %1709 = vmatprep.subr.mxu0 0.0
    %1710 = vmatpush1.msra.mxu0 %v1120
    %1711 = vmatprep.subr.mxu0 0.0
    %1712 = vmatpush1.msra.mxu0 %v1119
    %1713 = vmatprep.subr.mxu0 0.0
    %1714 = vmatpush1.msra.mxu0 %v1118
    %1715 = vmatprep.subr.mxu0 0.0
    %1716 = vmatpush2.msra.mxu0 0.0
    %1717 = vmatprep.subr.mxu0 0.0
    %1718 = vmatpush2.msra.mxu0 0.0
    %1719 = vmatprep.subr.mxu0 0.0
    %1720 = vmatpush2.msra.mxu0 0.0
    %1721 = vmatprep.subr.mxu0 0.0
    %1722 = vmatpush2.msra.mxu0 0.0
    %1723 = vmatprep.subr.mxu0 0.0
    %1724 = vmatpush2.msra.mxu0 0.0
    %1725 = vmatprep.subr.mxu0 0.0
    %1726 = vmatpush2.msra.mxu0 0.0
    %1727 = vmatprep.subr.mxu0 0.0
    %1728 = vmatpush2.msra.mxu0 0.0
    %1729 = vmatprep.subr.mxu0 0.0
    %1730 = vmatpush2.msra.mxu0 0.0
    %1731 = vmatprep.subr.mxu0 0.0
    %1732 = vmatpush2.msra.mxu0 0.0
    %1733 = vmatprep.subr.mxu0 0.0
    %1734 = vmatpush2.msra.mxu0 0.0
    %1735 = vmatprep.subr.mxu0 0.0
    %1736 = vmatpush2.msra.mxu0 0.0
    %1737 = vmatprep.subr.mxu0 0.0
    %1738 = vmatpush2.msra.mxu0 0.0
    %1739 = vmatprep.subr.mxu0 0.0
    %1740 = vmatpush2.msra.mxu0 0.0
    %1741 = vmatprep.subr.mxu0 0.0
    %1742 = vmatpush2.msra.mxu0 0.0
    %1743 = vmatprep.subr.mxu0 0.0
    %1744 = vmatpush2.msra.mxu0 0.0
    %1745 = vmatprep.subr.mxu0 0.0
    %1746 = vmatpush2.msra.mxu0 0.0
    %1747 = vmatprep.mubr.f32.mxu0 0.0
    %1748 = vmatmul.mubr.f32.gmra.mxu0 %v1681
    %v1749 = vpop.f32.mrf.mxu0
    %v1750 = vadd.f32 0.0, %v1749
    %v1751 = vpop.f32.mrf.mxu0
    %1752 = vdwg.mxu0
    %v1753 = vadd.f32 %v1677, %v1750
    %v1754 = vtanh.pop %v1753
    %v1755 = vxor.u32 %v1753, 2147483648
    %v1756 = vmul.f32 %v1755, 1.442695
    %v1757 = vpow.pop %v1756
    %v1758 = vadd.f32 %v1757, 1.0
    %v1759 = vrcp.pop %v1758
    %v1760 = vmul.f32 1.0, %v1759
    %v1761 = vsel %vm106, %v1754, %v1760
    %v1762 = vmul.f32 %v1761, %v1670
    %1764 = vrot.lane.b32.xlu0 %v1761, 64
    %v1765 = vpop.permute.xlu0 %1764
    %v1767 = vmul.f32 %v1761, %v1765
    %1769 = vrot.lane.b32.xlu0 %v1767, 32
    %v1770 = vpop.permute.xlu0 %1769
    %v1772 = vadd.f32 %v1762, %v1770
    %v1773 = vtanh.pop %v1772
    %1775 = vrot.lane.b32.xlu0 %v1773, 64
    %v1776 = vpop.permute.xlu0 %1775
    %v1778 = vmul.f32 %v1761, %v1776
    %v1779 = vld [vmem:[%s796] sm:$0xff]
    %1781 = vrot.lane.b32.xlu0 %v1778, 32
    %v1782 = vpop.permute.xlu0 %1781
    %v1783 = vsel %vm267, %v1782, 0
    %1785 = vmatprep.subr.mxu0 0.0
    %1786 = vmatpush1.msra.mxu0 0.0
    %1787 = vmatprep.subr.mxu0 0.0
    %1788 = vmatpush1.msra.mxu0 0.0
    %1789 = vmatprep.subr.mxu0 0.0
    %1790 = vmatpush1.msra.mxu0 0.0
    %1791 = vmatprep.subr.mxu0 0.0
    %1792 = vmatpush1.msra.mxu0 0.0
    %1793 = vmatprep.subr.mxu0 0.0
    %1794 = vmatpush1.msra.mxu0 0.0
    %1795 = vmatprep.subr.mxu0 0.0
    %1796 = vmatpush1.msra.mxu0 0.0
    %1797 = vmatprep.subr.mxu0 0.0
    %1798 = vmatpush1.msra.mxu0 0.0
    %1799 = vmatprep.subr.mxu0 0.0
    %1800 = vmatpush1.msra.mxu0 0.0
    %1801 = vmatprep.subr.mxu0 0.0
    %1802 = vmatpush1.msra.mxu0 0.0
    %1803 = vmatprep.subr.mxu0 0.0
    %1804 = vmatpush1.msra.mxu0 0.0
    %1805 = vmatprep.subr.mxu0 0.0
    %1806 = vmatpush1.msra.mxu0 0.0
    %1807 = vmatprep.subr.mxu0 0.0
    %1808 = vmatpush1.msra.mxu0 0.0
    %1809 = vmatprep.subr.mxu0 0.0
    %1810 = vmatpush1.msra.mxu0 %v1121
    %1811 = vmatprep.subr.mxu0 0.0
    %1812 = vmatpush1.msra.mxu0 %v1120
    %1813 = vmatprep.subr.mxu0 0.0
    %1814 = vmatpush1.msra.mxu0 %v1119
    %1815 = vmatprep.subr.mxu0 0.0
    %1816 = vmatpush1.msra.mxu0 %v1118
    %1817 = vmatprep.subr.mxu0 0.0
    %1818 = vmatpush2.msra.mxu0 0.0
    %1819 = vmatprep.subr.mxu0 0.0
    %1820 = vmatpush2.msra.mxu0 0.0
    %1821 = vmatprep.subr.mxu0 0.0
    %1822 = vmatpush2.msra.mxu0 0.0
    %1823 = vmatprep.subr.mxu0 0.0
    %1824 = vmatpush2.msra.mxu0 0.0
    %1825 = vmatprep.subr.mxu0 0.0
    %1826 = vmatpush2.msra.mxu0 0.0
    %1827 = vmatprep.subr.mxu0 0.0
    %1828 = vmatpush2.msra.mxu0 0.0
    %1829 = vmatprep.subr.mxu0 0.0
    %1830 = vmatpush2.msra.mxu0 0.0
    %1831 = vmatprep.subr.mxu0 0.0
    %1832 = vmatpush2.msra.mxu0 0.0
    %1833 = vmatprep.subr.mxu0 0.0
    %1834 = vmatpush2.msra.mxu0 0.0
    %1835 = vmatprep.subr.mxu0 0.0
    %1836 = vmatpush2.msra.mxu0 0.0
    %1837 = vmatprep.subr.mxu0 0.0
    %1838 = vmatpush2.msra.mxu0 0.0
    %1839 = vmatprep.subr.mxu0 0.0
    %1840 = vmatpush2.msra.mxu0 0.0
    %1841 = vmatprep.subr.mxu0 0.0
    %1842 = vmatpush2.msra.mxu0 0.0
    %1843 = vmatprep.subr.mxu0 0.0
    %1844 = vmatpush2.msra.mxu0 0.0
    %1845 = vmatprep.subr.mxu0 0.0
    %1846 = vmatpush2.msra.mxu0 0.0
    %1847 = vmatprep.subr.mxu0 0.0
    %1848 = vmatpush2.msra.mxu0 0.0
    %1849 = vmatprep.mubr.f32.mxu0 0.0
    %1850 = vmatmul.mubr.f32.gmra.mxu0 %v1783
    %v1851 = vpop.f32.mrf.mxu0
    %v1852 = vadd.f32 0.0, %v1851
    %v1853 = vpop.f32.mrf.mxu0
    %1854 = vdwg.mxu0
    %v1855 = vadd.f32 %v1779, %v1852
    %v1856 = vtanh.pop %v1855
    %v1857 = vxor.u32 %v1855, 2147483648
    %v1858 = vmul.f32 %v1857, 1.442695
    %v1859 = vpow.pop %v1858
    %v1860 = vadd.f32 %v1859, 1.0
    %v1861 = vrcp.pop %v1860
    %v1862 = vmul.f32 1.0, %v1861
    %v1863 = vsel %vm106, %v1856, %v1862
    %v1864 = vmul.f32 %v1863, %v1772
    %1866 = vrot.lane.b32.xlu0 %v1863, 64
    %v1867 = vpop.permute.xlu0 %1866
    %v1869 = vmul.f32 %v1863, %v1867
    %1871 = vrot.lane.b32.xlu0 %v1869, 32
    %v1872 = vpop.permute.xlu0 %1871
    %v1874 = vadd.f32 %v1864, %v1872
    %v1875 = vtanh.pop %v1874
    %1877 = vrot.lane.b32.xlu0 %v1875, 64
    %v1878 = vpop.permute.xlu0 %1877
    %v1880 = vmul.f32 %v1863, %v1878
    %v1881 = vld [vmem:[%s902] sm:$0xff]
    %1883 = vrot.lane.b32.xlu0 %v1880, 32
    %v1884 = vpop.permute.xlu0 %1883
    %v1885 = vsel %vm267, %v1884, 0
    %1887 = vmatprep.subr.mxu0 0.0
    %1888 = vmatpush1.msra.mxu0 0.0
    %1889 = vmatprep.subr.mxu0 0.0
    %1890 = vmatpush1.msra.mxu0 0.0
    %1891 = vmatprep.subr.mxu0 0.0
    %1892 = vmatpush1.msra.mxu0 0.0
    %1893 = vmatprep.subr.mxu0 0.0
    %1894 = vmatpush1.msra.mxu0 0.0
    %1895 = vmatprep.subr.mxu0 0.0
    %1896 = vmatpush1.msra.mxu0 0.0
    %1897 = vmatprep.subr.mxu0 0.0
    %1898 = vmatpush1.msra.mxu0 0.0
    %1899 = vmatprep.subr.mxu0 0.0
    %1900 = vmatpush1.msra.mxu0 0.0
    %1901 = vmatprep.subr.mxu0 0.0
    %1902 = vmatpush1.msra.mxu0 0.0
    %1903 = vmatprep.subr.mxu0 0.0
    %1904 = vmatpush1.msra.mxu0 0.0
    %1905 = vmatprep.subr.mxu0 0.0
    %1906 = vmatpush1.msra.mxu0 0.0
    %1907 = vmatprep.subr.mxu0 0.0
    %1908 = vmatpush1.msra.mxu0 0.0
    %1909 = vmatprep.subr.mxu0 0.0
    %1910 = vmatpush1.msra.mxu0 0.0
    %1911 = vmatprep.subr.mxu0 0.0
    %1912 = vmatpush1.msra.mxu0 %v1121
    %1913 = vmatprep.subr.mxu0 0.0
    %1914 = vmatpush1.msra.mxu0 %v1120
    %1915 = vmatprep.subr.mxu0 0.0
    %1916 = vmatpush1.msra.mxu0 %v1119
    %1917 = vmatprep.subr.mxu0 0.0
    %1918 = vmatpush1.msra.mxu0 %v1118
    %1919 = vmatprep.subr.mxu0 0.0
    %1920 = vmatpush2.msra.mxu0 0.0
    %1921 = vmatprep.subr.mxu0 0.0
    %1922 = vmatpush2.msra.mxu0 0.0
    %1923 = vmatprep.subr.mxu0 0.0
    %1924 = vmatpush2.msra.mxu0 0.0
    %1925 = vmatprep.subr.mxu0 0.0
    %1926 = vmatpush2.msra.mxu0 0.0
    %1927 = vmatprep.subr.mxu0 0.0
    %1928 = vmatpush2.msra.mxu0 0.0
    %1929 = vmatprep.subr.mxu0 0.0
    %1930 = vmatpush2.msra.mxu0 0.0
    %1931 = vmatprep.subr.mxu0 0.0
    %1932 = vmatpush2.msra.mxu0 0.0
    %1933 = vmatprep.subr.mxu0 0.0
    %1934 = vmatpush2.msra.mxu0 0.0
    %1935 = vmatprep.subr.mxu0 0.0
    %1936 = vmatpush2.msra.mxu0 0.0
    %1937 = vmatprep.subr.mxu0 0.0
    %1938 = vmatpush2.msra.mxu0 0.0
    %1939 = vmatprep.subr.mxu0 0.0
    %1940 = vmatpush2.msra.mxu0 0.0
    %1941 = vmatprep.subr.mxu0 0.0
    %1942 = vmatpush2.msra.mxu0 0.0
    %1943 = vmatprep.subr.mxu0 0.0
    %1944 = vmatpush2.msra.mxu0 0.0
    %1945 = vmatprep.subr.mxu0 0.0
    %1946 = vmatpush2.msra.mxu0 0.0
    %1947 = vmatprep.subr.mxu0 0.0
    %1948 = vmatpush2.msra.mxu0 0.0
    %1949 = vmatprep.subr.mxu0 0.0
    %1950 = vmatpush2.msra.mxu0 0.0
    %1951 = vmatprep.mubr.f32.mxu0 0.0
    %1952 = vmatmul.mubr.f32.gmra.mxu0 %v1885
    %v1953 = vpop.f32.mrf.mxu0
    %v1954 = vadd.f32 0.0, %v1953
    %v1955 = vpop.f32.mrf.mxu0
    %1956 = vdwg.mxu0
    %v1957 = vadd.f32 %v1881, %v1954
    %v1958 = vtanh.pop %v1957
    %v1959 = vxor.u32 %v1957, 2147483648
    %v1960 = vmul.f32 %v1959, 1.442695
    %v1961 = vpow.pop %v1960
    %v1962 = vadd.f32 %v1961, 1.0
    %v1963 = vrcp.pop %v1962
    %v1964 = vmul.f32 1.0, %v1963
    %v1965 = vsel %vm106, %v1958, %v1964
    %v1966 = vmul.f32 %v1965, %v1874
    %1968 = vrot.lane.b32.xlu0 %v1965, 64
    %v1969 = vpop.permute.xlu0 %1968
    %v1971 = vmul.f32 %v1965, %v1969
    %1973 = vrot.lane.b32.xlu0 %v1971, 32
    %v1974 = vpop.permute.xlu0 %1973
    %v1976 = vadd.f32 %v1966, %v1974
    %v1977 = vtanh.pop %v1976
    %1979 = vrot.lane.b32.xlu0 %v1977, 64
    %v1980 = vpop.permute.xlu0 %1979
    %v1982 = vmul.f32 %v1965, %v1980
    %v1983 = vld [vmem:[%s1008] sm:$0xff]
    %1985 = vrot.lane.b32.xlu0 %v1982, 32
    %v1986 = vpop.permute.xlu0 %1985
    %v1987 = vsel %vm267, %v1986, 0
    %1989 = vmatprep.subr.mxu0 0.0
    %1990 = vmatpush1.msra.mxu0 0.0
    %1991 = vmatprep.subr.mxu0 0.0
    %1992 = vmatpush1.msra.mxu0 0.0
    %1993 = vmatprep.subr.mxu0 0.0
    %1994 = vmatpush1.msra.mxu0 0.0
    %1995 = vmatprep.subr.mxu0 0.0
    %1996 = vmatpush1.msra.mxu0 0.0
    %1997 = vmatprep.subr.mxu0 0.0
    %1998 = vmatpush1.msra.mxu0 0.0
    %1999 = vmatprep.subr.mxu0 0.0
    %2000 = vmatpush1.msra.mxu0 0.0
    %2001 = vmatprep.subr.mxu0 0.0
    %2002 = vmatpush1.msra.mxu0 0.0
    %2003 = vmatprep.subr.mxu0 0.0
    %2004 = vmatpush1.msra.mxu0 0.0
    %2005 = vmatprep.subr.mxu0 0.0
    %2006 = vmatpush1.msra.mxu0 0.0
    %2007 = vmatprep.subr.mxu0 0.0
    %2008 = vmatpush1.msra.mxu0 0.0
    %2009 = vmatprep.subr.mxu0 0.0
    %2010 = vmatpush1.msra.mxu0 0.0
    %2011 = vmatprep.subr.mxu0 0.0
    %2012 = vmatpush1.msra.mxu0 0.0
    %2013 = vmatprep.subr.mxu0 0.0
    %2014 = vmatpush1.msra.mxu0 %v1121
    %2015 = vmatprep.subr.mxu0 0.0
    %2016 = vmatpush1.msra.mxu0 %v1120
    %2017 = vmatprep.subr.mxu0 0.0
    %2018 = vmatpush1.msra.mxu0 %v1119
    %2019 = vmatprep.subr.mxu0 0.0
    %2020 = vmatpush1.msra.mxu0 %v1118
    %2021 = vmatprep.subr.mxu0 0.0
    %2022 = vmatpush2.msra.mxu0 0.0
    %2023 = vmatprep.subr.mxu0 0.0
    %2024 = vmatpush2.msra.mxu0 0.0
    %2025 = vmatprep.subr.mxu0 0.0
    %2026 = vmatpush2.msra.mxu0 0.0
    %2027 = vmatprep.subr.mxu0 0.0
    %2028 = vmatpush2.msra.mxu0 0.0
    %2029 = vmatprep.subr.mxu0 0.0
    %2030 = vmatpush2.msra.mxu0 0.0
    %2031 = vmatprep.subr.mxu0 0.0
    %2032 = vmatpush2.msra.mxu0 0.0
    %2033 = vmatprep.subr.mxu0 0.0
    %2034 = vmatpush2.msra.mxu0 0.0
    %2035 = vmatprep.subr.mxu0 0.0
    %2036 = vmatpush2.msra.mxu0 0.0
    %2037 = vmatprep.subr.mxu0 0.0
    %2038 = vmatpush2.msra.mxu0 0.0
    %2039 = vmatprep.subr.mxu0 0.0
    %2040 = vmatpush2.msra.mxu0 0.0
    %2041 = vmatprep.subr.mxu0 0.0
    %2042 = vmatpush2.msra.mxu0 0.0
    %2043 = vmatprep.subr.mxu0 0.0
    %2044 = vmatpush2.msra.mxu0 0.0
    %2045 = vmatprep.subr.mxu0 0.0
    %2046 = vmatpush2.msra.mxu0 0.0
    %2047 = vmatprep.subr.mxu0 0.0
    %2048 = vmatpush2.msra.mxu0 0.0
    %2049 = vmatprep.subr.mxu0 0.0
    %2050 = vmatpush2.msra.mxu0 0.0
    %2051 = vmatprep.subr.mxu0 0.0
    %2052 = vmatpush2.msra.mxu0 0.0
    %2053 = vmatprep.mubr.f32.mxu0 0.0
    %2054 = vmatmul.mubr.f32.gmra.mxu0 %v1987
    %v2055 = vpop.f32.mrf.mxu0
    %v2056 = vadd.f32 0.0, %v2055
    %v2057 = vpop.f32.mrf.mxu0
    %2058 = vdwg.mxu0
    %v2059 = vadd.f32 %v1983, %v2056
    %v2060 = vtanh.pop %v2059
    %v2061 = vxor.u32 %v2059, 2147483648
    %v2062 = vmul.f32 %v2061, 1.442695
    %v2063 = vpow.pop %v2062
    %v2064 = vadd.f32 %v2063, 1.0
    %v2065 = vrcp.pop %v2064
    %v2066 = vmul.f32 1.0, %v2065
    %v2067 = vsel %vm106, %v2060, %v2066
    %v2068 = vmul.f32 %v2067, %v1976
    %2070 = vrot.lane.b32.xlu0 %v2067, 64
    %v2071 = vpop.permute.xlu0 %2070
    %v2073 = vmul.f32 %v2067, %v2071
    %2075 = vrot.lane.b32.xlu0 %v2073, 32
    %v2076 = vpop.permute.xlu0 %2075
    %v2078 = vadd.f32 %v2068, %v2076
    %v2079 = vtanh.pop %v2078
    %2081 = vrot.lane.b32.xlu0 %v2079, 64
    %v2082 = vpop.permute.xlu0 %2081
    %v2084 = vmul.f32 %v2067, %v2082
    %v2085 = vld [vmem:[%s7] sm:$0x1]
    %v2087 = vlaneseq
    %v2088 = vshrl.u32 %v2087, 7
    %v2089 = vsub.s32 0, %v2088
    %v2090 = vrot.slane %v2085, %v2089
    %2091 = vrot.lane.b32.xlu0 %v2090, 96
    %v2092 = vpop.permute.xlu0 %2091
    %v2094 = vmul.f32 %v2084, %v2092
    %2096 = vrot.lane.b32.xlu0 %v2094, 32
    %v2097 = vpop.permute.xlu0 %2096
    %v2099 = vsel %vm267, %v2097, 0.0
    %2100 = vadd.xlane.f32.xlu0 %v2099
    %v2101 = vpop.xlane.xlu0 %2100
    %v2102 = vld [vmem:[#allocation4] sm:$0x1]
    %v2104 = vlaneseq
    %v2105 = vshrl.u32 %v2104, 7
    %v2106 = vsub.s32 0, %v2105
    %v2107 = vrot.slane %v2102, %v2106
    %v2109 = vadd.f32 %v2101, %v2107
    %v2110 = vxor.u32 %v2109, 2147483648
    %v2111 = vmul.f32 %v2110, 1.442695
    %v2112 = vpow.pop %v2111
    %v2113 = vadd.f32 %v2112, 1.0
    %v2114 = vrcp.pop %v2113
    %v2115 = vmul.f32 1.0, %v2114
    %vm2116 = vcmask 7168
    %2117 = vst.msk [vmem:[%s9] sm:$0xff] %vm2116, %v2115
    // Predicated region
    $region58: #{tpu_custom_call.1} parent=1 // pred_check
      _
    $region59: #{tpu_custom_call.1} parent=1 // pred_check_branch
      %2119 = sbr.rel (0) target = $region61
    $region60: #{tpu_custom_call.1} parent=1 // pred_region
      _
    $region61: #{tpu_custom_call.1} parent=1 // pred_fallthru
      _
    // Predicated region
    $region62: #{tpu_custom_call.1} parent=1 // pred_check
      _
    $region63: #{tpu_custom_call.1} parent=1 // pred_check_branch
      %2121 = sbr.rel (0) target = $region65
    $region64: #{tpu_custom_call.1} parent=1 // pred_region
      _
    $region65: #{tpu_custom_call.1} parent=1 // pred_fallthru
      _
    %2122 = vsyncpa [#allocation6], 1
    %2123 = vsyncpa [#allocation8], 1
    %2124 = vsyncpa [#allocation11], 1

</llo_original>
